<compile_context>
chip_gen: v7x
topology: tpu7x:2x2x1
jax: 0.10.0
libtpu: 0.0.40
codegen_flags: <defaults>
</compile_context>

<pallas_src>
import functools

import jax
import jax.numpy as jnp
from jax.experimental import pallas as pl
from jax.experimental.pallas import tpu as pltpu

BN_EPS = 1e-5  # PyTorch BatchNorm1d default eps


def _r8(k):
    """Round up to the f32 sublane tile (8)."""
    return -(-k // 8) * 8


def _bn_train(v, gamma, beta, axis):
    """PyTorch BatchNorm1d in training mode: batch mean + *biased* variance."""
    mu = jnp.mean(v, axis=axis, keepdims=True)
    var = jnp.mean((v - mu) ** 2, axis=axis, keepdims=True)
    return (v - mu) * jax.lax.rsqrt(var + BN_EPS) * gamma + beta
    # TODO(synk): running_mean/running_var updates (training-mode buffer side
    # effect) are not tracked; they do not affect the forward outputs.


def embedding_net_kernel(xa_ref, wpack_ref, vpack_ref, slab_ref, loss_ref,
                         *, lambda_, d0, d1, a_dim):
    Bblk, n, kin = xa_ref.shape
    N = Bblk * n
    K1, O1 = d0 + a_dim, 2 * d0         # layer 1 : [x|a]   -> [h1|h2]
    K2, O2 = 2 * d0, 2 * d1             # layer 2 : [h1|h2] -> [z1|z2]
    K3, O3 = 2 * d1, d0 + a_dim         # rec     : [z1|z2] -> [x_|a_logits]
    R1, R2 = _r8(K1), _r8(K2)
    assert kin == R1  # wrapper pads the activation input to the sublane tile

    xa3 = xa_ref[...]                    # (Bblk, n, R1) == [x | a | 0-pad]
    xa = xa3.reshape(N, kin)             # batched rows for the MXU

    # Packed weights (single grid-invariant DMA), static ref-view slices.
    w1 = wpack_ref[0:R1, 0:O1]                       # blockdiag(w11, w21)
    w2 = wpack_ref[R1:R1 + K2, 0:O2]                 # blockdiag(w12, w22)
    w3 = wpack_ref[R1 + R2:R1 + R2 + K3, 0:O3]       # [w13 | rolled w23]

    # Packed row vectors (single grid-invariant DMA).
    bias1 = vpack_ref[0:1, 0:O1]         # [b11 | b21]
    gamma1 = vpack_ref[1:2, 0:O1]        # [g1  | g1 ]
    beta1 = vpack_ref[2:3, 0:O1]         # [bt1 | bt1]
    bias2 = vpack_ref[3:4, 0:O2]         # [b12 | b22]
    brec = vpack_ref[4:5, 0:O3]          # [b13 | b23]
    g2 = vpack_ref[5:6, 0:d1]
    bt2 = vpack_ref[6:7, 0:d1]

    # ---- transform(): l11(x) & l21(a) fused, per-minibatch bn1, relu ----
    pre1 = jnp.dot(xa, w1, preferred_element_type=jnp.float32) + bias1   # (N, 2*d0)
    h3 = jnp.maximum(
        _bn_train(pre1.reshape(Bblk, n, O1), gamma1, beta1, axis=1), 0.0)

    # l12(h1) & l22(h2) fused: the result IS zcat = [z1 | z2].
    zcat = jnp.dot(h3.reshape(N, O1), w2,
                   preferred_element_type=jnp.float32) + bias2           # (N, 2*d1)

    # ---- reconstruction(): l13(cat[z1,z2]) & l23(cat[z2,z1]) fused ----
    rec = jnp.dot(zcat, w3, preferred_element_type=jnp.float32) + brec   # (N, d0+a_dim)
    zcat3 = zcat.reshape(Bblk, n, O2)
    rec3 = rec.reshape(Bblk, n, O3)
    xrec3 = rec3[:, :, 0:d0]
    arec3 = jax.nn.sigmoid(rec3[:, :, d0:d0 + a_dim])   # only needed for loss_R1

    # Single lane-dense slab store: [ z1 | z2 | x_ | 0-pad ].
    pad_w = slab_ref.shape[2] - (O2 + d0)
    parts = [zcat3, xrec3]
    if pad_w:
        parts.append(jnp.zeros((Bblk, n, pad_w), jnp.float32))
    slab_ref[...] = jnp.concatenate(parts, axis=-1)

    # ---- compute_loss(), per minibatch (issued after the slab writeback) ----
    ii = jax.lax.broadcasted_iota(jnp.int32, (d1, d1), 0)
    jj = jax.lax.broadcasted_iota(jnp.int32, (d1, d1), 1)
    eye = ii == jj
    for b in range(Bblk):                # static unroll; Bblk is small
        x_b = xa3[b, :, 0:d0]
        a_b = xa3[b, :, d0:d0 + a_dim]
        r1 = lambda_[0] * jnp.sum((a_b - arec3[b]) ** 2, keepdims=True) / (n * a_dim)
        r2 = lambda_[1] * jnp.sum((x_b - xrec3[b]) ** 2, keepdims=True) / (n * d0)

        z1n = _bn_train(zcat3[b, :, 0:d1], g2, bt2, axis=0)
        z2n = _bn_train(zcat3[b, :, d1:2 * d1], g2, bt2, axis=0)
        # c = bn2(z1).T @ bn2(z2) / N : contract over the batch axis on the MXU.
        c = jax.lax.dot_general(z1n, z2n, (((0,), (0,)), ((), ())),
                                preferred_element_type=jnp.float32) / n
        # Exact diagonal / off-diagonal split (matches torch.diagonal and
        # off_diagonal(); no cancellation-prone subtraction of near-equal sums).
        on_diag = jnp.sum(jnp.where(eye, (c - 1.0) ** 2, 0.0), keepdims=True)
        off_diag = jnp.sum(jnp.where(eye, 0.0, c * c), keepdims=True)
        cm = lambda_[2] * (on_diag + lambda_[3] * off_diag)

        loss_ref[b] = jnp.concatenate([r1, r2, cm, r1 + r2 + cm], axis=1)  # (1, 4)


def _pack_params(params, d0, d1, a_dim):
    """Build the two packed parameter arrays (weights pack, row-vector pack)."""
    K1, O1 = d0 + a_dim, 2 * d0
    K2, O2 = 2 * d0, 2 * d1
    K3, O3 = 2 * d1, d0 + a_dim
    R1, R2, R3 = _r8(K1), _r8(K2), _r8(K3)
    wcols = max(O1, O2, O3)

    wpack = jnp.zeros((R1 + R2 + R3, wcols), jnp.float32)
    # layer 1: blockdiag(w11, w21); rows follow the [x | a] input layout.
    wpack = wpack.at[0:d0, 0:d0].set(params['w11'])
    wpack = wpack.at[d0:d0 + a_dim, d0:2 * d0].set(params['w21'])
    # layer 2: blockdiag(w12, w22); rows follow the [h1 | h2] layout.
    wpack = wpack.at[R1:R1 + d0, 0:d1].set(params['w12'])
    wpack = wpack.at[R1 + d0:R1 + 2 * d0, d1:2 * d1].set(params['w22'])
    # reconstruction: [w13 | roll(w23)] so one zcat=[z1|z2] operand feeds both
    # l13(cat[z1,z2]) and l23(cat[z2,z1]).
    w23r = jnp.concatenate([params['w23'][d1:], params['w23'][:d1]], axis=0)
    wpack = wpack.at[R1 + R2:R1 + R2 + 2 * d1, 0:d0].set(params['w13'])
    wpack = wpack.at[R1 + R2:R1 + R2 + 2 * d1, d0:d0 + a_dim].set(w23r)

    vpack = jnp.zeros((8, wcols), jnp.float32)
    vpack = vpack.at[0, 0:O1].set(jnp.concatenate([params['b11'][0], params['b21'][0]]))
    vpack = vpack.at[1, 0:O1].set(jnp.concatenate([params['g1'][0], params['g1'][0]]))
    vpack = vpack.at[2, 0:O1].set(jnp.concatenate([params['bt1'][0], params['bt1'][0]]))
    vpack = vpack.at[3, 0:O2].set(jnp.concatenate([params['b12'][0], params['b22'][0]]))
    vpack = vpack.at[4, 0:O3].set(jnp.concatenate([params['b13'][0], params['b23'][0]]))
    vpack = vpack.at[5, 0:d1].set(params['g2'][0])
    vpack = vpack.at[6, 0:d1].set(params['bt2'][0])
    return wpack, vpack


def embedding_net_forward(x, a, params, lambda_, dim, num_blocks=None):
    """x: (n, d0) or (B, n, d0); a: (n, 20) or (B, n, 20).

    A leading B axis is a stack of independent minibatches; each reproduces one
    original Embedding_Net.forward call (per-minibatch BN statistics and
    per-minibatch losses).
    """
    single = x.ndim == 2
    if single:
        x, a = x[None], a[None]
    x = x.astype(jnp.float32)
    a = a.astype(jnp.float32)
    B, n, d0 = x.shape
    a_dim = a.shape[-1]
    d1 = dim[1]
    assert d0 == dim[0]

    if num_blocks is None:
        # 2 grid steps give v7x's two TensorCores work; otherwise fully fold.
        num_blocks = 2 if (B % 2 == 0 and B >= 4) else 1
    assert B % num_blocks == 0
    Bblk = B // num_blocks

    # One lane-packed activation input per row: [ x | a | 0-pad ].
    K1 = d0 + a_dim
    R1 = _r8(K1)
    act_parts = [x, a]
    if R1 > K1:
        act_parts.append(jnp.zeros((B, n, R1 - K1), jnp.float32))
    xa = jnp.concatenate(act_parts, axis=-1)              # (B, n, R1)

    wpack, vpack = _pack_params(params, d0, d1, a_dim)    # 2 grid-invariant DMAs

    slab_w = 128 * pl.cdiv(2 * d1 + d0, 128)              # lane-dense output slab

    kernel = functools.partial(
        embedding_net_kernel,
        lambda_=tuple(float(l) for l in lambda_),
        d0=d0, d1=d1, a_dim=a_dim)

    slab, losses = pl.pallas_call(
        kernel,
        grid=(num_blocks,),
        in_specs=[
            pl.BlockSpec((Bblk, n, R1), lambda g: (g, 0, 0)),
            pl.BlockSpec(wpack.shape, lambda g: (0, 0)),
            pl.BlockSpec(vpack.shape, lambda g: (0, 0)),
        ],
        out_specs=(
            pl.BlockSpec((Bblk, n, slab_w), lambda g: (g, 0, 0)),
            pl.BlockSpec((Bblk, 1, 4), lambda g: (g, 0, 0)),
        ),
        out_shape=(
            jax.ShapeDtypeStruct((B, n, slab_w), jnp.float32),   # [z1|z2|x_|pad]
            jax.ShapeDtypeStruct((B, 1, 4), jnp.float32),        # [r1,r2,cm,loss]
        ),
        compiler_params=pltpu.CompilerParams(
            dimension_semantics=("parallel",)),
    )(xa, wpack, vpack)

    z1 = slab[..., 0:d1]
    z2 = slab[..., d1:2 * d1]
    x_ = slab[..., 2 * d1:2 * d1 + d0]
    losses = losses[:, 0, :]
    r1, r2, cm, loss = losses[:, 0], losses[:, 1], losses[:, 2], losses[:, 3]

    if single:
        x, z1, z2, x_ = x[0], z1[0], z2[0], x_[0]
        r1, r2, cm, loss = r1[0], r2[0], cm[0], loss[0]

    return {'z1': z1, 'z2': z2, 'x': x, 'x_': x_,
            'r1': r1, 'r2': r2, 'cm': cm, 'loss': loss}


def init_params(key, dim, a_dim=20):
    d0, d1 = dim
    keys = jax.random.split(key, 6)

    def lin(k, fan_in, fan_out):
        k1, k2 = jax.random.split(k)
        bound = fan_in ** -0.5  # PyTorch nn.Linear default init range
        w = jax.random.uniform(k1, (fan_in, fan_out), jnp.float32, -bound, bound)
        b = jax.random.uniform(k2, (1, fan_out), jnp.float32, -bound, bound)
        return w, b

    p = {}
    p['w11'], p['b11'] = lin(keys[0], d0, d0)       # weights stored (in, out)
    p['w12'], p['b12'] = lin(keys[1], d0, d1)
    p['w13'], p['b13'] = lin(keys[2], 2 * d1, d0)
    p['w21'], p['b21'] = lin(keys[3], a_dim, d0)
    p['w22'], p['b22'] = lin(keys[4], d0, d1)
    p['w23'], p['b23'] = lin(keys[5], 2 * d1, a_dim)
    p['g1'] = jnp.ones((1, d0), jnp.float32)    # bn1 weight
    p['bt1'] = jnp.zeros((1, d0), jnp.float32)  # bn1 bias
    p['g2'] = jnp.ones((1, d1), jnp.float32)    # bn2 weight
    p['bt2'] = jnp.zeros((1, d1), jnp.float32)  # bn2 bias
    return p


if __name__ == "__main__":
    dim = (32, 16)                       # dim[0], dim[1]
    lambda_ = (1.0, 1.0, 1.0, 0.0051)    # lambda_[0..3]
    batch = 8                            # rows per forward (per-minibatch BN)
    a_dim = 20                           # l21 expects 20 input features
    num_minibatches = 4                  # stacked independent forward calls

    key = jax.random.PRNGKey(0)
    kx, ka, kp = jax.random.split(key, 3)
    x = jax.random.normal(kx, (num_minibatches, batch, dim[0]), jnp.float32)
    a = jax.random.normal(ka, (num_minibatches, batch, a_dim), jnp.float32)
    params = init_params(kp, dim, a_dim)

    package = embedding_net_forward(x, a, params, lambda_, dim)
    jax.block_until_ready(package)
    print("KERNEL_OK")
</pallas_src>

<mosaic_0001>
module attributes {stable_mosaic.version = 11 : i64} {
  func.func @embedding_net_kernel(%arg0: i32, %arg1: memref<2x8x56xf32, #tpu.memory_space<vmem>>, %arg2: memref<152x64xf32, #tpu.memory_space<vmem>>, %arg3: memref<8x64xf32, #tpu.memory_space<vmem>>, %arg4: memref<2x8x128xf32, #tpu.memory_space<vmem>>, %arg5: memref<2x1x4xf32, #tpu.memory_space<vmem>>) attributes {dimension_semantics = [#tpu.dimension_semantics<parallel>], iteration_bounds = array<i64: 2>, scalar_prefetch = 0 : i64, scratch_operands = 0 : i64, tpu.core_type = #tpu.core_type<tc>, window_params = [{transform_indices = @transform_0, window_bounds = array<i64: 2, 8, 56>}, {pipeline_mode = #tpu.pipeline_mode<synchronous>, transform_indices = @transform_1, window_bounds = array<i64: 152, 64>}, {pipeline_mode = #tpu.pipeline_mode<synchronous>, transform_indices = @transform_2, window_bounds = array<i64: 8, 64>}, {transform_indices = @transform_3, window_bounds = array<i64: 2, 8, 128>}, {transform_indices = @transform_4, window_bounds = array<i64: 2, 1, 4>}]} {
    %c0 = arith.constant 0 : index
    %c0_0 = arith.constant 0 : index
    %c0_1 = arith.constant 0 : index
    %0 = vector.load %arg1[%c0, %c0_0, %c0_1] : memref<2x8x56xf32, #tpu.memory_space<vmem>>, vector<2x8x56xf32>
    %1 = vector.shape_cast %0 : vector<2x8x56xf32> to vector<16x56xf32>
    %c0_2 = arith.constant 0 : index
    %c0_3 = arith.constant 0 : index
    %2 = vector.load %arg2[%c0_2, %c0_3] : memref<152x64xf32, #tpu.memory_space<vmem>>, vector<56x64xf32>
    %c56 = arith.constant 56 : index
    %c0_4 = arith.constant 0 : index
    %3 = vector.load %arg2[%c56, %c0_4] : memref<152x64xf32, #tpu.memory_space<vmem>>, vector<64x32xf32>
    %c120 = arith.constant 120 : index
    %c0_5 = arith.constant 0 : index
    %4 = vector.load %arg2[%c120, %c0_5] : memref<152x64xf32, #tpu.memory_space<vmem>>, vector<32x52xf32>
    %c0_6 = arith.constant 0 : index
    %c0_7 = arith.constant 0 : index
    %5 = vector.load %arg3[%c0_6, %c0_7] : memref<8x64xf32, #tpu.memory_space<vmem>>, vector<1x64xf32>
    %c1 = arith.constant 1 : index
    %c0_8 = arith.constant 0 : index
    %6 = vector.load %arg3[%c1, %c0_8] : memref<8x64xf32, #tpu.memory_space<vmem>>, vector<1x64xf32>
    %c2 = arith.constant 2 : index
    %c0_9 = arith.constant 0 : index
    %7 = vector.load %arg3[%c2, %c0_9] : memref<8x64xf32, #tpu.memory_space<vmem>>, vector<1x64xf32>
    %c3 = arith.constant 3 : index
    %c0_10 = arith.constant 0 : index
    %8 = vector.load %arg3[%c3, %c0_10] : memref<8x64xf32, #tpu.memory_space<vmem>>, vector<1x32xf32>
    %c4 = arith.constant 4 : index
    %c0_11 = arith.constant 0 : index
    %9 = vector.load %arg3[%c4, %c0_11] : memref<8x64xf32, #tpu.memory_space<vmem>>, vector<1x52xf32>
    %c5 = arith.constant 5 : index
    %c0_12 = arith.constant 0 : index
    %10 = vector.load %arg3[%c5, %c0_12] : memref<8x64xf32, #tpu.memory_space<vmem>>, vector<1x16xf32>
    %c6 = arith.constant 6 : index
    %c0_13 = arith.constant 0 : index
    %11 = vector.load %arg3[%c6, %c0_13] : memref<8x64xf32, #tpu.memory_space<vmem>>, vector<1x16xf32>
    %cst = arith.constant dense<0.000000e+00> : vector<16x64xf32>
    %12 = tpu.matmul %1, %2, %cst {dimension_numbers = #tpu.dot_dimension_numbers<[1], [0], [0], [1], [0, 0, 1, 1], [], []>} : vector<16x56xf32>, vector<56x64xf32>, vector<16x64xf32> -> vector<16x64xf32>
    %13 = vector.broadcast %5 : vector<1x64xf32> to vector<16x64xf32>
    %14 = arith.addf %12, %13 : vector<16x64xf32>
    %15 = vector.shape_cast %14 : vector<16x64xf32> to vector<2x8x64xf32>
    %cst_14 = arith.constant dense<0.000000e+00> : vector<2x64xf32>
    %16 = vector.multi_reduction <add>, %15, %cst_14 [1] : vector<2x8x64xf32> to vector<2x64xf32>
    %17 = vector.shape_cast %16 : vector<2x64xf32> to vector<2x1x64xf32>
    %cst_15 = arith.constant 8.000000e+00 : f32
    %18 = vector.broadcast %cst_15 : f32 to vector<2x1x64xf32>
    %19 = arith.divf %17, %18 : vector<2x1x64xf32>
    %20 = vector.broadcast %19 : vector<2x1x64xf32> to vector<2x8x64xf32>
    %21 = arith.subf %15, %20 : vector<2x8x64xf32>
    %22 = arith.mulf %21, %21 : vector<2x8x64xf32>
    %cst_16 = arith.constant dense<0.000000e+00> : vector<2x64xf32>
    %23 = vector.multi_reduction <add>, %22, %cst_16 [1] : vector<2x8x64xf32> to vector<2x64xf32>
    %24 = vector.shape_cast %23 : vector<2x64xf32> to vector<2x1x64xf32>
    %cst_17 = arith.constant 8.000000e+00 : f32
    %25 = vector.broadcast %cst_17 : f32 to vector<2x1x64xf32>
    %26 = arith.divf %24, %25 : vector<2x1x64xf32>
    %27 = vector.broadcast %19 : vector<2x1x64xf32> to vector<2x8x64xf32>
    %28 = arith.subf %15, %27 : vector<2x8x64xf32>
    %cst_18 = arith.constant 9.99999974E-6 : f32
    %29 = vector.broadcast %cst_18 : f32 to vector<2x1x64xf32>
    %30 = arith.addf %26, %29 : vector<2x1x64xf32>
    %31 = math.rsqrt %30 : vector<2x1x64xf32>
    %32 = vector.broadcast %31 : vector<2x1x64xf32> to vector<2x8x64xf32>
    %33 = arith.mulf %28, %32 : vector<2x8x64xf32>
    %34 = vector.shape_cast %6 : vector<1x64xf32> to vector<1x1x64xf32>
    %35 = vector.broadcast %34 : vector<1x1x64xf32> to vector<2x8x64xf32>
    %36 = arith.mulf %33, %35 : vector<2x8x64xf32>
    %37 = vector.shape_cast %7 : vector<1x64xf32> to vector<1x1x64xf32>
    %38 = vector.broadcast %37 : vector<1x1x64xf32> to vector<2x8x64xf32>
    %39 = arith.addf %36, %38 : vector<2x8x64xf32>
    %cst_19 = arith.constant 0.000000e+00 : f32
    %40 = vector.broadcast %cst_19 : f32 to vector<2x8x64xf32>
    %41 = arith.maximumf %39, %40 : vector<2x8x64xf32>
    %42 = vector.shape_cast %41 : vector<2x8x64xf32> to vector<16x64xf32>
    %cst_20 = arith.constant dense<0.000000e+00> : vector<16x32xf32>
    %43 = tpu.matmul %42, %3, %cst_20 {dimension_numbers = #tpu.dot_dimension_numbers<[1], [0], [0], [1], [0, 0, 1, 1], [], []>} : vector<16x64xf32>, vector<64x32xf32>, vector<16x32xf32> -> vector<16x32xf32>
    %44 = vector.broadcast %8 : vector<1x32xf32> to vector<16x32xf32>
    %45 = arith.addf %43, %44 : vector<16x32xf32>
    %cst_21 = arith.constant dense<0.000000e+00> : vector<16x52xf32>
    %46 = tpu.matmul %45, %4, %cst_21 {dimension_numbers = #tpu.dot_dimension_numbers<[1], [0], [0], [1], [0, 0, 1, 1], [], []>} : vector<16x32xf32>, vector<32x52xf32>, vector<16x52xf32> -> vector<16x52xf32>
    %47 = vector.broadcast %9 : vector<1x52xf32> to vector<16x52xf32>
    %48 = arith.addf %46, %47 : vector<16x52xf32>
    %49 = vector.shape_cast %45 : vector<16x32xf32> to vector<2x8x32xf32>
    %50 = vector.shape_cast %48 : vector<16x52xf32> to vector<2x8x52xf32>
    %51 = vector.extract_strided_slice %50 {offsets = [0, 0, 0], sizes = [2, 8, 32], strides = [1, 1, 1]} : vector<2x8x52xf32> to vector<2x8x32xf32>
    %52 = vector.extract_strided_slice %50 {offsets = [0, 0, 32], sizes = [2, 8, 20], strides = [1, 1, 1]} : vector<2x8x52xf32> to vector<2x8x20xf32>
    %53 = arith.negf %52 : vector<2x8x20xf32>
    %54 = math.exp %53 : vector<2x8x20xf32>
    %cst_22 = arith.constant 1.000000e+00 : f32
    %55 = vector.broadcast %cst_22 : f32 to vector<2x8x20xf32>
    %56 = arith.addf %55, %54 : vector<2x8x20xf32>
    %57 = arith.divf %55, %56 : vector<2x8x20xf32>
    %cst_23 = arith.constant 0.000000e+00 : f32
    %58 = vector.broadcast %cst_23 : f32 to vector<2x8x64xf32>
    %59 = tpu.concatenate %49, %51, %58 in 2 : vector<2x8x32xf32>, vector<2x8x32xf32>, vector<2x8x64xf32> -> vector<2x8x128xf32>
    %c0_24 = arith.constant 0 : index
    %c0_25 = arith.constant 0 : index
    %c0_26 = arith.constant 0 : index
    %60 = vector.load %arg4[%c0_24, %c0_25, %c0_26] : memref<2x8x128xf32, #tpu.memory_space<vmem>>, vector<2x8x128xf32>
    tpu.vector_store %arg4[%c0_24, %c0_25, %c0_26], %59 {strides = array<i32>} : memref<2x8x128xf32, #tpu.memory_space<vmem>>, vector<2x8x128xf32>,
    %61 = tpu.iota {dimensions = array<i32: 0>} : vector<16x16xi32>
    %62 = tpu.iota {dimensions = array<i32: 1>} : vector<16x16xi32>
    %63 = arith.cmpi eq, %61, %62 : vector<16x16xi32>
    %64 = vector.extract_strided_slice %0 {offsets = [0, 0, 0], sizes = [1, 8, 32], strides = [1, 1, 1]} : vector<2x8x56xf32> to vector<1x8x32xf32>
    %65 = vector.shape_cast %64 : vector<1x8x32xf32> to vector<8x32xf32>
    %66 = vector.extract_strided_slice %0 {offsets = [0, 0, 32], sizes = [1, 8, 20], strides = [1, 1, 1]} : vector<2x8x56xf32> to vector<1x8x20xf32>
    %67 = vector.shape_cast %66 : vector<1x8x20xf32> to vector<8x20xf32>
    %68 = vector.extract_strided_slice %57 {offsets = [0, 0, 0], sizes = [1, 8, 20], strides = [1, 1, 1]} : vector<2x8x20xf32> to vector<1x8x20xf32>
    %69 = vector.shape_cast %68 : vector<1x8x20xf32> to vector<8x20xf32>
    %70 = arith.subf %67, %69 : vector<8x20xf32>
    %71 = arith.mulf %70, %70 : vector<8x20xf32>
    %72 = vector.shape_cast %71 : vector<8x20xf32> to vector<1x8x20xf32>
    %cst_27 = arith.constant dense<0.000000e+00> : vector<1xf32>
    %73 = vector.multi_reduction <add>, %72, %cst_27 [1, 2] : vector<1x8x20xf32> to vector<1xf32>
    %74 = vector.shape_cast %73 : vector<1xf32> to vector<1x1x1xf32>
    %75 = vector.extract %74[0, 0, 0] : f32 from vector<1x1x1xf32>
    %76 = vector.broadcast %75 : f32 to vector<1x1xf32>
    %cst_28 = arith.constant 1.000000e+00 : f32
    %77 = vector.broadcast %cst_28 : f32 to vector<1x1xf32>
    %78 = arith.mulf %77, %76 : vector<1x1xf32>
    %cst_29 = arith.constant 1.600000e+02 : f32
    %79 = vector.broadcast %cst_29 : f32 to vector<1x1xf32>
    %80 = arith.divf %78, %79 : vector<1x1xf32>
    %81 = vector.extract_strided_slice %51 {offsets = [0, 0, 0], sizes = [1, 8, 32], strides = [1, 1, 1]} : vector<2x8x32xf32> to vector<1x8x32xf32>
    %82 = vector.shape_cast %81 : vector<1x8x32xf32> to vector<8x32xf32>
    %83 = arith.subf %65, %82 : vector<8x32xf32>
    %84 = arith.mulf %83, %83 : vector<8x32xf32>
    %85 = vector.shape_cast %84 : vector<8x32xf32> to vector<1x8x32xf32>
    %cst_30 = arith.constant dense<0.000000e+00> : vector<1xf32>
    %86 = vector.multi_reduction <add>, %85, %cst_30 [1, 2] : vector<1x8x32xf32> to vector<1xf32>
    %87 = vector.shape_cast %86 : vector<1xf32> to vector<1x1x1xf32>
    %88 = vector.extract %87[0, 0, 0] : f32 from vector<1x1x1xf32>
    %89 = vector.broadcast %88 : f32 to vector<1x1xf32>
    %cst_31 = arith.constant 1.000000e+00 : f32
    %90 = vector.broadcast %cst_31 : f32 to vector<1x1xf32>
    %91 = arith.mulf %90, %89 : vector<1x1xf32>
    %cst_32 = arith.constant 2.560000e+02 : f32
    %92 = vector.broadcast %cst_32 : f32 to vector<1x1xf32>
    %93 = arith.divf %91, %92 : vector<1x1xf32>
    %94 = vector.extract_strided_slice %49 {offsets = [0, 0, 0], sizes = [1, 8, 16], strides = [1, 1, 1]} : vector<2x8x32xf32> to vector<1x8x16xf32>
    %95 = vector.shape_cast %94 : vector<1x8x16xf32> to vector<8x16xf32>
    %cst_33 = arith.constant dense<0.000000e+00> : vector<16xf32>
    %96 = vector.multi_reduction <add>, %95, %cst_33 [0] : vector<8x16xf32> to vector<16xf32>
    %97 = vector.shape_cast %96 : vector<16xf32> to vector<1x16xf32>
    %cst_34 = arith.constant 8.000000e+00 : f32
    %98 = vector.broadcast %cst_34 : f32 to vector<1x16xf32>
    %99 = arith.divf %97, %98 : vector<1x16xf32>
    %100 = vector.broadcast %99 : vector<1x16xf32> to vector<8x16xf32>
    %101 = arith.subf %95, %100 : vector<8x16xf32>
    %102 = arith.mulf %101, %101 : vector<8x16xf32>
    %cst_35 = arith.constant dense<0.000000e+00> : vector<16xf32>
    %103 = vector.multi_reduction <add>, %102, %cst_35 [0] : vector<8x16xf32> to vector<16xf32>
    %104 = vector.shape_cast %103 : vector<16xf32> to vector<1x16xf32>
    %cst_36 = arith.constant 8.000000e+00 : f32
    %105 = vector.broadcast %cst_36 : f32 to vector<1x16xf32>
    %106 = arith.divf %104, %105 : vector<1x16xf32>
    %107 = vector.broadcast %99 : vector<1x16xf32> to vector<8x16xf32>
    %108 = arith.subf %95, %107 : vector<8x16xf32>
    %cst_37 = arith.constant 9.99999974E-6 : f32
    %109 = vector.broadcast %cst_37 : f32 to vector<1x16xf32>
    %110 = arith.addf %106, %109 : vector<1x16xf32>
    %111 = math.rsqrt %110 : vector<1x16xf32>
    %112 = vector.broadcast %111 : vector<1x16xf32> to vector<8x16xf32>
    %113 = arith.mulf %108, %112 : vector<8x16xf32>
    %114 = vector.broadcast %10 : vector<1x16xf32> to vector<8x16xf32>
    %115 = arith.mulf %113, %114 : vector<8x16xf32>
    %116 = vector.broadcast %11 : vector<1x16xf32> to vector<8x16xf32>
    %117 = arith.addf %115, %116 : vector<8x16xf32>
    %118 = vector.extract_strided_slice %49 {offsets = [0, 0, 16], sizes = [1, 8, 16], strides = [1, 1, 1]} : vector<2x8x32xf32> to vector<1x8x16xf32>
    %119 = vector.shape_cast %118 : vector<1x8x16xf32> to vector<8x16xf32>
    %cst_38 = arith.constant dense<0.000000e+00> : vector<16xf32>
    %120 = vector.multi_reduction <add>, %119, %cst_38 [0] : vector<8x16xf32> to vector<16xf32>
    %121 = vector.shape_cast %120 : vector<16xf32> to vector<1x16xf32>
    %cst_39 = arith.constant 8.000000e+00 : f32
    %122 = vector.broadcast %cst_39 : f32 to vector<1x16xf32>
    %123 = arith.divf %121, %122 : vector<1x16xf32>
    %124 = vector.broadcast %123 : vector<1x16xf32> to vector<8x16xf32>
    %125 = arith.subf %119, %124 : vector<8x16xf32>
    %126 = arith.mulf %125, %125 : vector<8x16xf32>
    %cst_40 = arith.constant dense<0.000000e+00> : vector<16xf32>
    %127 = vector.multi_reduction <add>, %126, %cst_40 [0] : vector<8x16xf32> to vector<16xf32>
    %128 = vector.shape_cast %127 : vector<16xf32> to vector<1x16xf32>
    %cst_41 = arith.constant 8.000000e+00 : f32
    %129 = vector.broadcast %cst_41 : f32 to vector<1x16xf32>
    %130 = arith.divf %128, %129 : vector<1x16xf32>
    %131 = vector.broadcast %123 : vector<1x16xf32> to vector<8x16xf32>
    %132 = arith.subf %119, %131 : vector<8x16xf32>
    %cst_42 = arith.constant 9.99999974E-6 : f32
    %133 = vector.broadcast %cst_42 : f32 to vector<1x16xf32>
    %134 = arith.addf %130, %133 : vector<1x16xf32>
    %135 = math.rsqrt %134 : vector<1x16xf32>
    %136 = vector.broadcast %135 : vector<1x16xf32> to vector<8x16xf32>
    %137 = arith.mulf %132, %136 : vector<8x16xf32>
    %138 = vector.broadcast %10 : vector<1x16xf32> to vector<8x16xf32>
    %139 = arith.mulf %137, %138 : vector<8x16xf32>
    %140 = vector.broadcast %11 : vector<1x16xf32> to vector<8x16xf32>
    %141 = arith.addf %139, %140 : vector<8x16xf32>
    %cst_43 = arith.constant dense<0.000000e+00> : vector<16x16xf32>
    %142 = tpu.matmul %117, %141, %cst_43 {dimension_numbers = #tpu.dot_dimension_numbers<[0], [0], [1], [1], [0, 1, 1, 1], [], []>} : vector<8x16xf32>, vector<8x16xf32>, vector<16x16xf32> -> vector<16x16xf32>
    %cst_44 = arith.constant 8.000000e+00 : f32
    %143 = vector.broadcast %cst_44 : f32 to vector<16x16xf32>
    %144 = arith.divf %142, %143 : vector<16x16xf32>
    %cst_45 = arith.constant 1.000000e+00 : f32
    %145 = vector.broadcast %cst_45 : f32 to vector<16x16xf32>
    %146 = arith.subf %144, %145 : vector<16x16xf32>
    %147 = arith.mulf %146, %146 : vector<16x16xf32>
    %cst_46 = arith.constant 0.000000e+00 : f32
    %148 = vector.broadcast %cst_46 : f32 to vector<16x16xf32>
    %149 = arith.select %63, %147, %148 : vector<16x16xi1>, vector<16x16xf32>
    %150 = vector.shape_cast %149 : vector<16x16xf32> to vector<1x16x16xf32>
    %cst_47 = arith.constant dense<0.000000e+00> : vector<1xf32>
    %151 = vector.multi_reduction <add>, %150, %cst_47 [1, 2] : vector<1x16x16xf32> to vector<1xf32>
    %152 = vector.shape_cast %151 : vector<1xf32> to vector<1x1x1xf32>
    %153 = vector.extract %152[0, 0, 0] : f32 from vector<1x1x1xf32>
    %154 = vector.broadcast %153 : f32 to vector<1x1xf32>
    %155 = arith.mulf %144, %144 : vector<16x16xf32>
    %cst_48 = arith.constant 0.000000e+00 : f32
    %156 = vector.broadcast %cst_48 : f32 to vector<16x16xf32>
    %157 = arith.select %63, %156, %155 : vector<16x16xi1>, vector<16x16xf32>
    %158 = vector.shape_cast %157 : vector<16x16xf32> to vector<1x16x16xf32>
    %cst_49 = arith.constant dense<0.000000e+00> : vector<1xf32>
    %159 = vector.multi_reduction <add>, %158, %cst_49 [1, 2] : vector<1x16x16xf32> to vector<1xf32>
    %160 = vector.shape_cast %159 : vector<1xf32> to vector<1x1x1xf32>
    %161 = vector.extract %160[0, 0, 0] : f32 from vector<1x1x1xf32>
    %162 = vector.broadcast %161 : f32 to vector<1x1xf32>
    %cst_50 = arith.constant 5.100000e-03 : f32
    %163 = vector.broadcast %cst_50 : f32 to vector<1x1xf32>
    %164 = arith.mulf %163, %162 : vector<1x1xf32>
    %165 = arith.addf %154, %164 : vector<1x1xf32>
    %cst_51 = arith.constant 1.000000e+00 : f32
    %166 = vector.broadcast %cst_51 : f32 to vector<1x1xf32>
    %167 = arith.mulf %166, %165 : vector<1x1xf32>
    %168 = arith.addf %80, %93 : vector<1x1xf32>
    %169 = arith.addf %168, %167 : vector<1x1xf32>
    %170 = tpu.concatenate %80, %93, %167, %169 in 1 : vector<1x1xf32>, vector<1x1xf32>, vector<1x1xf32>, vector<1x1xf32> -> vector<1x4xf32>
    %c0_52 = arith.constant 0 : index
    %c0_53 = arith.constant 0 : index
    %c0_54 = arith.constant 0 : index
    %171 = vector.load %arg5[%c0_52, %c0_53, %c0_54] : memref<2x1x4xf32, #tpu.memory_space<vmem>>, vector<1x1x4xf32>
    %172 = vector.shape_cast %171 : vector<1x1x4xf32> to vector<1x4xf32>
    %173 = vector.shape_cast %170 : vector<1x4xf32> to vector<1x1x4xf32>
    tpu.vector_store %arg5[%c0_52, %c0_53, %c0_54], %173 {strides = array<i32>} : memref<2x1x4xf32, #tpu.memory_space<vmem>>, vector<1x1x4xf32>,
    %174 = vector.extract_strided_slice %0 {offsets = [1, 0, 0], sizes = [1, 8, 32], strides = [1, 1, 1]} : vector<2x8x56xf32> to vector<1x8x32xf32>
    %175 = vector.shape_cast %174 : vector<1x8x32xf32> to vector<8x32xf32>
    %176 = vector.extract_strided_slice %0 {offsets = [1, 0, 32], sizes = [1, 8, 20], strides = [1, 1, 1]} : vector<2x8x56xf32> to vector<1x8x20xf32>
    %177 = vector.shape_cast %176 : vector<1x8x20xf32> to vector<8x20xf32>
    %178 = vector.extract_strided_slice %57 {offsets = [1, 0, 0], sizes = [1, 8, 20], strides = [1, 1, 1]} : vector<2x8x20xf32> to vector<1x8x20xf32>
    %179 = vector.shape_cast %178 : vector<1x8x20xf32> to vector<8x20xf32>
    %180 = arith.subf %177, %179 : vector<8x20xf32>
    %181 = arith.mulf %180, %180 : vector<8x20xf32>
    %182 = vector.shape_cast %181 : vector<8x20xf32> to vector<1x8x20xf32>
    %cst_55 = arith.constant dense<0.000000e+00> : vector<1xf32>
    %183 = vector.multi_reduction <add>, %182, %cst_55 [1, 2] : vector<1x8x20xf32> to vector<1xf32>
    %184 = vector.shape_cast %183 : vector<1xf32> to vector<1x1x1xf32>
    %185 = vector.extract %184[0, 0, 0] : f32 from vector<1x1x1xf32>
    %186 = vector.broadcast %185 : f32 to vector<1x1xf32>
    %cst_56 = arith.constant 1.000000e+00 : f32
    %187 = vector.broadcast %cst_56 : f32 to vector<1x1xf32>
    %188 = arith.mulf %187, %186 : vector<1x1xf32>
    %cst_57 = arith.constant 1.600000e+02 : f32
    %189 = vector.broadcast %cst_57 : f32 to vector<1x1xf32>
    %190 = arith.divf %188, %189 : vector<1x1xf32>
    %191 = vector.extract_strided_slice %51 {offsets = [1, 0, 0], sizes = [1, 8, 32], strides = [1, 1, 1]} : vector<2x8x32xf32> to vector<1x8x32xf32>
    %192 = vector.shape_cast %191 : vector<1x8x32xf32> to vector<8x32xf32>
    %193 = arith.subf %175, %192 : vector<8x32xf32>
    %194 = arith.mulf %193, %193 : vector<8x32xf32>
    %195 = vector.shape_cast %194 : vector<8x32xf32> to vector<1x8x32xf32>
    %cst_58 = arith.constant dense<0.000000e+00> : vector<1xf32>
    %196 = vector.multi_reduction <add>, %195, %cst_58 [1, 2] : vector<1x8x32xf32> to vector<1xf32>
    %197 = vector.shape_cast %196 : vector<1xf32> to vector<1x1x1xf32>
    %198 = vector.extract %197[0, 0, 0] : f32 from vector<1x1x1xf32>
    %199 = vector.broadcast %198 : f32 to vector<1x1xf32>
    %cst_59 = arith.constant 1.000000e+00 : f32
    %200 = vector.broadcast %cst_59 : f32 to vector<1x1xf32>
    %201 = arith.mulf %200, %199 : vector<1x1xf32>
    %cst_60 = arith.constant 2.560000e+02 : f32
    %202 = vector.broadcast %cst_60 : f32 to vector<1x1xf32>
    %203 = arith.divf %201, %202 : vector<1x1xf32>
    %204 = vector.extract_strided_slice %49 {offsets = [1, 0, 0], sizes = [1, 8, 16], strides = [1, 1, 1]} : vector<2x8x32xf32> to vector<1x8x16xf32>
    %205 = vector.shape_cast %204 : vector<1x8x16xf32> to vector<8x16xf32>
    %cst_61 = arith.constant dense<0.000000e+00> : vector<16xf32>
    %206 = vector.multi_reduction <add>, %205, %cst_61 [0] : vector<8x16xf32> to vector<16xf32>
    %207 = vector.shape_cast %206 : vector<16xf32> to vector<1x16xf32>
    %cst_62 = arith.constant 8.000000e+00 : f32
    %208 = vector.broadcast %cst_62 : f32 to vector<1x16xf32>
    %209 = arith.divf %207, %208 : vector<1x16xf32>
    %210 = vector.broadcast %209 : vector<1x16xf32> to vector<8x16xf32>
    %211 = arith.subf %205, %210 : vector<8x16xf32>
    %212 = arith.mulf %211, %211 : vector<8x16xf32>
    %cst_63 = arith.constant dense<0.000000e+00> : vector<16xf32>
    %213 = vector.multi_reduction <add>, %212, %cst_63 [0] : vector<8x16xf32> to vector<16xf32>
    %214 = vector.shape_cast %213 : vector<16xf32> to vector<1x16xf32>
    %cst_64 = arith.constant 8.000000e+00 : f32
    %215 = vector.broadcast %cst_64 : f32 to vector<1x16xf32>
    %216 = arith.divf %214, %215 : vector<1x16xf32>
    %217 = vector.broadcast %209 : vector<1x16xf32> to vector<8x16xf32>
    %218 = arith.subf %205, %217 : vector<8x16xf32>
    %cst_65 = arith.constant 9.99999974E-6 : f32
    %219 = vector.broadcast %cst_65 : f32 to vector<1x16xf32>
    %220 = arith.addf %216, %219 : vector<1x16xf32>
    %221 = math.rsqrt %220 : vector<1x16xf32>
    %222 = vector.broadcast %221 : vector<1x16xf32> to vector<8x16xf32>
    %223 = arith.mulf %218, %222 : vector<8x16xf32>
    %224 = vector.broadcast %10 : vector<1x16xf32> to vector<8x16xf32>
    %225 = arith.mulf %223, %224 : vector<8x16xf32>
    %226 = vector.broadcast %11 : vector<1x16xf32> to vector<8x16xf32>
    %227 = arith.addf %225, %226 : vector<8x16xf32>
    %228 = vector.extract_strided_slice %49 {offsets = [1, 0, 16], sizes = [1, 8, 16], strides = [1, 1, 1]} : vector<2x8x32xf32> to vector<1x8x16xf32>
    %229 = vector.shape_cast %228 : vector<1x8x16xf32> to vector<8x16xf32>
    %cst_66 = arith.constant dense<0.000000e+00> : vector<16xf32>
    %230 = vector.multi_reduction <add>, %229, %cst_66 [0] : vector<8x16xf32> to vector<16xf32>
    %231 = vector.shape_cast %230 : vector<16xf32> to vector<1x16xf32>
    %cst_67 = arith.constant 8.000000e+00 : f32
    %232 = vector.broadcast %cst_67 : f32 to vector<1x16xf32>
    %233 = arith.divf %231, %232 : vector<1x16xf32>
    %234 = vector.broadcast %233 : vector<1x16xf32> to vector<8x16xf32>
    %235 = arith.subf %229, %234 : vector<8x16xf32>
    %236 = arith.mulf %235, %235 : vector<8x16xf32>
    %cst_68 = arith.constant dense<0.000000e+00> : vector<16xf32>
    %237 = vector.multi_reduction <add>, %236, %cst_68 [0] : vector<8x16xf32> to vector<16xf32>
    %238 = vector.shape_cast %237 : vector<16xf32> to vector<1x16xf32>
    %cst_69 = arith.constant 8.000000e+00 : f32
    %239 = vector.broadcast %cst_69 : f32 to vector<1x16xf32>
    %240 = arith.divf %238, %239 : vector<1x16xf32>
    %241 = vector.broadcast %233 : vector<1x16xf32> to vector<8x16xf32>
    %242 = arith.subf %229, %241 : vector<8x16xf32>
    %cst_70 = arith.constant 9.99999974E-6 : f32
    %243 = vector.broadcast %cst_70 : f32 to vector<1x16xf32>
    %244 = arith.addf %240, %243 : vector<1x16xf32>
    %245 = math.rsqrt %244 : vector<1x16xf32>
    %246 = vector.broadcast %245 : vector<1x16xf32> to vector<8x16xf32>
    %247 = arith.mulf %242, %246 : vector<8x16xf32>
    %248 = vector.broadcast %10 : vector<1x16xf32> to vector<8x16xf32>
    %249 = arith.mulf %247, %248 : vector<8x16xf32>
    %250 = vector.broadcast %11 : vector<1x16xf32> to vector<8x16xf32>
    %251 = arith.addf %249, %250 : vector<8x16xf32>
    %cst_71 = arith.constant dense<0.000000e+00> : vector<16x16xf32>
    %252 = tpu.matmul %227, %251, %cst_71 {dimension_numbers = #tpu.dot_dimension_numbers<[0], [0], [1], [1], [0, 1, 1, 1], [], []>} : vector<8x16xf32>, vector<8x16xf32>, vector<16x16xf32> -> vector<16x16xf32>
    %cst_72 = arith.constant 8.000000e+00 : f32
    %253 = vector.broadcast %cst_72 : f32 to vector<16x16xf32>
    %254 = arith.divf %252, %253 : vector<16x16xf32>
    %cst_73 = arith.constant 1.000000e+00 : f32
    %255 = vector.broadcast %cst_73 : f32 to vector<16x16xf32>
    %256 = arith.subf %254, %255 : vector<16x16xf32>
    %257 = arith.mulf %256, %256 : vector<16x16xf32>
    %cst_74 = arith.constant 0.000000e+00 : f32
    %258 = vector.broadcast %cst_74 : f32 to vector<16x16xf32>
    %259 = arith.select %63, %257, %258 : vector<16x16xi1>, vector<16x16xf32>
    %260 = vector.shape_cast %259 : vector<16x16xf32> to vector<1x16x16xf32>
    %cst_75 = arith.constant dense<0.000000e+00> : vector<1xf32>
    %261 = vector.multi_reduction <add>, %260, %cst_75 [1, 2] : vector<1x16x16xf32> to vector<1xf32>
    %262 = vector.shape_cast %261 : vector<1xf32> to vector<1x1x1xf32>
    %263 = vector.extract %262[0, 0, 0] : f32 from vector<1x1x1xf32>
    %264 = vector.broadcast %263 : f32 to vector<1x1xf32>
    %265 = arith.mulf %254, %254 : vector<16x16xf32>
    %cst_76 = arith.constant 0.000000e+00 : f32
    %266 = vector.broadcast %cst_76 : f32 to vector<16x16xf32>
    %267 = arith.select %63, %266, %265 : vector<16x16xi1>, vector<16x16xf32>
    %268 = vector.shape_cast %267 : vector<16x16xf32> to vector<1x16x16xf32>
    %cst_77 = arith.constant dense<0.000000e+00> : vector<1xf32>
    %269 = vector.multi_reduction <add>, %268, %cst_77 [1, 2] : vector<1x16x16xf32> to vector<1xf32>
    %270 = vector.shape_cast %269 : vector<1xf32> to vector<1x1x1xf32>
    %271 = vector.extract %270[0, 0, 0] : f32 from vector<1x1x1xf32>
    %272 = vector.broadcast %271 : f32 to vector<1x1xf32>
    %cst_78 = arith.constant 5.100000e-03 : f32
    %273 = vector.broadcast %cst_78 : f32 to vector<1x1xf32>
    %274 = arith.mulf %273, %272 : vector<1x1xf32>
    %275 = arith.addf %264, %274 : vector<1x1xf32>
    %cst_79 = arith.constant 1.000000e+00 : f32
    %276 = vector.broadcast %cst_79 : f32 to vector<1x1xf32>
    %277 = arith.mulf %276, %275 : vector<1x1xf32>
    %278 = arith.addf %190, %203 : vector<1x1xf32>
    %279 = arith.addf %278, %277 : vector<1x1xf32>
    %280 = tpu.concatenate %190, %203, %277, %279 in 1 : vector<1x1xf32>, vector<1x1xf32>, vector<1x1xf32>, vector<1x1xf32> -> vector<1x4xf32>
    %c1_80 = arith.constant 1 : index
    %c0_81 = arith.constant 0 : index
    %c0_82 = arith.constant 0 : index
    %281 = vector.load %arg5[%c1_80, %c0_81, %c0_82] : memref<2x1x4xf32, #tpu.memory_space<vmem>>, vector<1x1x4xf32>
    %282 = vector.shape_cast %281 : vector<1x1x4xf32> to vector<1x4xf32>
    %283 = vector.shape_cast %280 : vector<1x4xf32> to vector<1x1x4xf32>
    tpu.vector_store %arg5[%c1_80, %c0_81, %c0_82], %283 {strides = array<i32>} : memref<2x1x4xf32, #tpu.memory_space<vmem>>, vector<1x1x4xf32>,
    return
  }
  func.func @transform_0(%arg0: i32) -> (i32, i32, i32) {
    %c0_i32 = arith.constant 0 : i32
    %c0_i32_0 = arith.constant 0 : i32
    %c0_i32_1 = arith.constant 0 : i32
    return %arg0, %c0_i32, %c0_i32_0 : i32, i32, i32
  }
  func.func @transform_1(%arg0: i32) -> (i32, i32) {
    %c0_i32 = arith.constant 0 : i32
    %c0_i32_0 = arith.constant 0 : i32
    %c0_i32_1 = arith.constant 0 : i32
    return %c0_i32, %c0_i32_0 : i32, i32
  }
  func.func @transform_2(%arg0: i32) -> (i32, i32) {
    %c0_i32 = arith.constant 0 : i32
    %c0_i32_0 = arith.constant 0 : i32
    %c0_i32_1 = arith.constant 0 : i32
    return %c0_i32, %c0_i32_0 : i32, i32
  }
  func.func @transform_3(%arg0: i32) -> (i32, i32, i32) {
    %c0_i32 = arith.constant 0 : i32
    %c0_i32_0 = arith.constant 0 : i32
    %c0_i32_1 = arith.constant 0 : i32
    return %arg0, %c0_i32, %c0_i32_0 : i32, i32, i32
  }
  func.func @transform_4(%arg0: i32) -> (i32, i32, i32) {
    %c0_i32 = arith.constant 0 : i32
    %c0_i32_0 = arith.constant 0 : i32
    %c0_i32_1 = arith.constant 0 : i32
    return %arg0, %c0_i32, %c0_i32_0 : i32, i32, i32
  }
}

</mosaic_0001>

<llo_original>
// kernel: tpu_custom_call.1
$region0: #{tpu_custom_call.1}
  #allocation0 [shape = 'u32[]', space=smem, size = 0x4, offset = 0x4, fixed_abs, tag = 'smem constant byte address 0x4 - core index']
  #allocation1 [shape = 'u32[144,128]{1,0:T(1,128)}', space=vmem, size = 0x12000, scoped, tag = 'internal scratch']
  %s0 = inlined_call_operand.vmem [shape: f32[4,8,56], index: 0, kind: input, shape index: {}]
  %s1 = inlined_call_operand.vmem [shape: f32[152,64], index: 1, kind: input, shape index: {}]
  %s2 = inlined_call_operand.vmem [shape: f32[8,64], index: 2, kind: input, shape index: {}]
  %s3 = inlined_call_operand.hbm [shape: f32[4,8,128], index: 3, kind: output, shape index: {0}]
  %s4 = inlined_call_operand.hbm [shape: f32[4,1,4], index: 4, kind: output, shape index: {1}]
  %5 = xla_tuple %s3, %s4
  %s6 = sld [smem:[#allocation0]]
  $region53: #{tpu_custom_call.1} parent=0
    _
  %s8 = ssub.s32 1, %s6
  %s9 = scalar_select 0, %s8, %s6
  $region1: #{tpu_custom_call.1} parent=0
    #allocation2 [shape = 'u8[16384]{0}', space=vmem, size = 0x4000, scoped, tag = 'output window, operand 0']
    #allocation3 [shape = 's32[2]{0}', space=sflag, size = 0x8, scoped, tag = 'scoped memory for tpu_custom_call.1']
    #allocation4 [shape = 'u8[2048]{0}', space=vmem, size = 0x800, scoped, tag = 'output window, operand 1']
    #allocation5 [shape = 's32[2]{0}', space=sflag, size = 0x8, scoped, tag = 'scoped memory for tpu_custom_call.1']
    %10 = vsyncpa [#allocation3], 0
    %s11 = scalar_lea.sflag [#allocation3], 1
    %12 = vsyncpa %s11, 0
    %13 = vsyncpa [#allocation5], 0
    %s14 = scalar_lea.sflag [#allocation5], 1
    %15 = vsyncpa %s14, 0
    loop: start=0, step=1, limit=4
    $region2: #{tpu_custom_call.1} parent=1 // loop_pre_header
      _
    $region3: #{tpu_custom_call.1} parent=1 // loop_header
      %s17 = sphi 0, %s21
      %p18 = scmp.ge.s32.totalorder %s17, 4
      %s27 = sphi 0, %s29
      %s30 = sphi 0, %s27
      %s31 = sphi 0, %s30
      %s47 = sphi 0, %s31
      %s51 = sphi 0, %s51
      %s53 = sphi 0, %s51
      %s54 = sphi 0, %s53
      %s68 = sphi 0, %s54
      %s72 = sphi 0, %s72
      %s74 = sphi 0, %s72
      %s75 = sphi 0, %s74
      %s89 = sphi 0, %s75
      %s95 = sphi 0, %s97
      %s98 = sphi 0, %s95
      %s99 = sphi 0, %s98
      %s115 = sphi 0, %s99
      %s121 = sphi 0, %s123
      %s124 = sphi 0, %s121
      %s125 = sphi 0, %s124
      %s141 = sphi 0, %s125
    $region4: #{tpu_custom_call.1} parent=1 // loop_header_branch
      %20 = sbr.rel (%p18) target = $region8
    $region5: #{tpu_custom_call.1} parent=1 // loop_body
      %s22 = ssub.s32 %s17, 1
      %s23 = ssub.s32 %s17, 2
      %s24 = sadd.s32 %s17, 1
      %s25 = ssub.s32 %s17, %s24
      %p26 = scmp.eq.s32.totalorder %s25, 0
      %s28 = sadd.s32 %s27, 1
      %s29 = scalar_select %p26, %s27, %s28
      %p32 = pneg %p26
      %p33 = scmp.eq.s32.totalorder %s17, 1
      %p34 = por %p32, %p33
      %p35 = scmp.ne.s32.totalorder %s27, %s30
      %p36 = scmp.eq.s32.totalorder %s17, 0
      %p37 = por %p35, %p36
      %p38 = scmp.ne.s32.totalorder %s27, %s30
      %p39 = scmp.eq.s32.totalorder %s22, 1
      %p40 = por %p38, %p39
      %p41 = scmp.ne.s32.totalorder %s30, %s31
      %p42 = scmp.eq.s32.totalorder %s22, 0
      %p43 = por %p41, %p42
      %p44 = scmp.ne.s32.totalorder %s30, %s31
      %p45 = scmp.eq.s32.totalorder %s23, 1
      %p46 = por %p44, %p45
      %p48 = scmp.ne.s32.totalorder %s31, %s47
      %p49 = scmp.eq.s32.totalorder %s23, 0
      %p50 = por %p48, %p49
      %s52 = sadd.s32 %s51, 1
      %p55 = scmp.eq.s32.totalorder %s17, 1
      %p56 = scmp.ne.s32.totalorder %s51, %s53
      %p57 = scmp.eq.s32.totalorder %s17, 0
      %p58 = por %p56, %p57
      %p59 = scmp.ne.s32.totalorder %s51, %s53
      %p60 = scmp.eq.s32.totalorder %s22, 1
      %p61 = por %p59, %p60
      %p62 = scmp.ne.s32.totalorder %s53, %s54
      %p63 = scmp.eq.s32.totalorder %s22, 0
      %p64 = por %p62, %p63
      %p65 = scmp.ne.s32.totalorder %s53, %s54
      %p66 = scmp.eq.s32.totalorder %s23, 1
      %p67 = por %p65, %p66
      %p69 = scmp.ne.s32.totalorder %s54, %s68
      %p70 = scmp.eq.s32.totalorder %s23, 0
      %p71 = por %p69, %p70
      %s73 = sadd.s32 %s72, 1
      %p76 = scmp.eq.s32.totalorder %s17, 1
      %p77 = scmp.ne.s32.totalorder %s72, %s74
      %p78 = scmp.eq.s32.totalorder %s17, 0
      %p79 = por %p77, %p78
      %p80 = scmp.ne.s32.totalorder %s72, %s74
      %p81 = scmp.eq.s32.totalorder %s22, 1
      %p82 = por %p80, %p81
      %p83 = scmp.ne.s32.totalorder %s74, %s75
      %p84 = scmp.eq.s32.totalorder %s22, 0
      %p85 = por %p83, %p84
      %p86 = scmp.ne.s32.totalorder %s74, %s75
      %p87 = scmp.eq.s32.totalorder %s23, 1
      %p88 = por %p86, %p87
      %p90 = scmp.ne.s32.totalorder %s75, %s89
      %p91 = scmp.eq.s32.totalorder %s23, 0
      %p92 = por %p90, %p91
      %s93 = ssub.s32 %s17, %s24
      %p94 = scmp.eq.s32.totalorder %s93, 0
      %s96 = sadd.s32 %s95, 1
      %s97 = scalar_select %p94, %s95, %s96
      %p100 = pneg %p94
      %p101 = scmp.eq.s32.totalorder %s17, 1
      %p102 = por %p100, %p101
      %p103 = scmp.ne.s32.totalorder %s95, %s98
      %p104 = scmp.eq.s32.totalorder %s17, 0
      %p105 = por %p103, %p104
      %p106 = scmp.ne.s32.totalorder %s95, %s98
      %p107 = scmp.eq.s32.totalorder %s22, 1
      %p108 = por %p106, %p107
      %p109 = scmp.ne.s32.totalorder %s98, %s99
      %p110 = scmp.eq.s32.totalorder %s22, 0
      %p111 = por %p109, %p110
      %p112 = scmp.ne.s32.totalorder %s98, %s99
      %p113 = scmp.eq.s32.totalorder %s23, 1
      %p114 = por %p112, %p113
      %p116 = scmp.ne.s32.totalorder %s99, %s115
      %p117 = scmp.eq.s32.totalorder %s23, 0
      %p118 = por %p116, %p117
      %s119 = ssub.s32 %s17, %s24
      %p120 = scmp.eq.s32.totalorder %s119, 0
      %s122 = sadd.s32 %s121, 1
      %s123 = scalar_select %p120, %s121, %s122
      %p126 = pneg %p120
      %p127 = scmp.eq.s32.totalorder %s17, 1
      %p128 = por %p126, %p127
      %p129 = scmp.ne.s32.totalorder %s121, %s124
      %p130 = scmp.eq.s32.totalorder %s17, 0
      %p131 = por %p129, %p130
      %p132 = scmp.ne.s32.totalorder %s121, %s124
      %p133 = scmp.eq.s32.totalorder %s22, 1
      %p134 = por %p132, %p133
      %p135 = scmp.ne.s32.totalorder %s124, %s125
      %p136 = scmp.eq.s32.totalorder %s22, 0
      %p137 = por %p135, %p136
      %p138 = scmp.ne.s32.totalorder %s124, %s125
      %p139 = scmp.eq.s32.totalorder %s23, 1
      %p140 = por %p138, %p139
      %p142 = scmp.ne.s32.totalorder %s125, %s141
      %p143 = scmp.eq.s32.totalorder %s23, 0
      %p144 = por %p142, %p143
      %p145 = scmp.le.s32.totalorder 1, %s17
      %p146 = scmp.lt.s32.totalorder %s17, 3
      %p147 = pnand %p145, %p146
      %p148 = pneg %p147
      // Predicated region
      $region9: #{tpu_custom_call.1} parent=5 // pred_check
        _
      $region10: #{tpu_custom_call.1} parent=5 // pred_check_branch
        %150 = sbr.rel (%p147) target = $region12
      $region11: #{tpu_custom_call.1} parent=5 // pred_region
        %s151 = ssub.s32 %s17, 1
        // Predicated region
        $region13: #{tpu_custom_call.1} parent=11 // pred_check
          %p152 = pneg %p64
        $region14: #{tpu_custom_call.1} parent=11 // pred_check_branch
          %154 = sbr.rel (%p152) target = $region16
        $region15: #{tpu_custom_call.1} parent=11 // pred_region
          _
        $region16: #{tpu_custom_call.1} parent=11 // pred_fallthru
          _
        // Predicated region
        $region17: #{tpu_custom_call.1} parent=11 // pred_check
          %p155 = pneg %p85
        $region18: #{tpu_custom_call.1} parent=11 // pred_check_branch
          %157 = sbr.rel (%p155) target = $region20
        $region19: #{tpu_custom_call.1} parent=11 // pred_region
          _
        $region20: #{tpu_custom_call.1} parent=11 // pred_fallthru
          _
      $region12: #{tpu_custom_call.1} parent=5 // pred_fallthru
        _
      %p158 = scmp.lt.s32.totalorder %s17, 2
      // Predicated region
      $region21: #{tpu_custom_call.1} parent=5 // pred_check
        %p159 = pneg %p158
      $region22: #{tpu_custom_call.1} parent=5 // pred_check_branch
        %161 = sbr.rel (%p159) target = $region24
      $region23: #{tpu_custom_call.1} parent=5 // pred_region
        // Predicated region
        $region25: #{tpu_custom_call.1} parent=23 // pred_check
          %p162 = pneg %p37
        $region26: #{tpu_custom_call.1} parent=23 // pred_check_branch
          %164 = sbr.rel (%p162) target = $region28
        $region27: #{tpu_custom_call.1} parent=23 // pred_region
          %s165 = smul.u32 2, %s17
          %p166 = scmp.lt.s32.totalorder %s165, 3
          %s167 = scalar_select %p166, %s165, 3
          %s168 = smul.addr %s167, 8
          %s169 = scalar_lea.vmem %s0, %s168
          %s170 = smul.u32 2, %s17
        $region28: #{tpu_custom_call.1} parent=23 // pred_fallthru
          _
      $region24: #{tpu_custom_call.1} parent=5 // pred_fallthru
        _
      %p171 = scmp.le.s32.totalorder 1, %s17
      %p172 = scmp.lt.s32.totalorder %s17, 3
      %p173 = pnand %p171, %p172
      %p174 = pneg %p173
      // Predicated region
      $region29: #{tpu_custom_call.1} parent=5 // pred_check
        _
      $region30: #{tpu_custom_call.1} parent=5 // pred_check_branch
        %176 = sbr.rel (%p173) target = $region32
      $region31: #{tpu_custom_call.1} parent=5 // pred_region
        %s177 = ssub.s32 %s17, 1
        %s178 = smul.u32 2, %s22
        %p179 = scmp.lt.s32.totalorder %s178, 3
        %s180 = scalar_select %p179, %s178, 3
        %s181 = smul.addr %s180, 8
        %s182 = scalar_lea.vmem %s0, %s181
        %p183 = pneg %p43
        %p184 = pneg %p40
        %p185 = pneg %p64
        %p186 = pneg %p61
        %p187 = pneg %p85
        %p188 = pneg %p82
        %p189 = pneg %p111
        %p190 = pneg %p108
        %s191 = sand.u32 %s98, 1
        %s192 = scalar_lea.sflag [#allocation3], %s191
        %s193 = sand.u32 %s98, 1
        %s194 = smul.addr %s193, 16
        %s195 = scalar_lea.vmem [#allocation2], %s194
        %p196 = pneg %p137
        %p197 = pneg %p134
        %s198 = sand.u32 %s124, 1
        %s199 = scalar_lea.sflag [#allocation5], %s198
        %s200 = sand.u32 %s124, 1
        %s201 = smul.addr %s200, 2
        %s202 = scalar_lea.vmem [#allocation4], %s201
        %s203 = smul.u32 2, %s22
        %p204 = scmp.lt.s32.totalorder %s203, 3
        %s205 = scalar_select %p204, %s203, 3
        %s206 = smul.addr %s205, 8
        %s207 = scalar_lea.vmem %s0, %s206
        %s208 = smul.u32 2, %s22
        %s209 = smul.u32 2, %s22
        %s210 = smul.u32 2, %s22
        %v211 = vld [vmem:[%s207] sm:$0xff]
        %v212 = vld [vmem:[%s207 + $0x8] sm:$0xff]
        %v213 = vld [vmem:[%s1] sm:$0xff]
        %v214 = vld [vmem:[%s1 + $0x8] sm:$0xff]
        %v215 = vld [vmem:[%s1 + $0x10] sm:$0xff]
        %v216 = vld [vmem:[%s1 + $0x18] sm:$0xff]
        %v217 = vld [vmem:[%s1 + $0x20] sm:$0xff]
        %v218 = vld [vmem:[%s1 + $0x28] sm:$0xff]
        %v219 = vld [vmem:[%s1 + $0x30] sm:$0xff]
        %v220 = vld [vmem:[%s1 + $0x38] sm:$0xff]
        %v221 = vld [vmem:[%s1 + $0x40] sm:$0xff]
        %v222 = vld [vmem:[%s1 + $0x48] sm:$0xff]
        %v223 = vld [vmem:[%s1 + $0x50] sm:$0xff]
        %v224 = vld [vmem:[%s1 + $0x58] sm:$0xff]
        %v225 = vld [vmem:[%s1 + $0x60] sm:$0xff]
        %v226 = vld [vmem:[%s1 + $0x68] sm:$0xff]
        %v227 = vld [vmem:[%s1 + $0x70] sm:$0xff]
        %v228 = vld [vmem:[%s1 + $0x78] sm:$0xff]
        %v229 = vld [vmem:[%s1 + $0x80] sm:$0xff]
        %v230 = vld [vmem:[%s1 + $0x88] sm:$0xff]
        %v231 = vld [vmem:[%s1 + $0x90] sm:$0xff]
        %v232 = vld [vmem:[%s2] sm:$0x1]
        %v233 = vld [vmem:[%s2 + $0x1] sm:$0x1]
        %v234 = vld [vmem:[%s2 + $0x2] sm:$0x1]
        %v235 = vld [vmem:[%s2 + $0x3] sm:$0x1]
        %v236 = vld [vmem:[%s2 + $0x4] sm:$0x1]
        %v237 = vld [vmem:[%s2 + $0x5] sm:$0x1]
        %v238 = vld [vmem:[%s2 + $0x6] sm:$0x1]
        %v239 = vlaneseq
        %v240 = vshrl.u32 %v239, 7
        %v241 = vsub.s32 0, %v240
        %v242 = vrot.slane %v232, %v241
        %vm243 = vcmask 457728
        %v245 = vsel %vm243, %v211, 0
        %v248 = vsel %vm243, %v212, 0
        %250 = vmatprep.subr.mxu0 0.0
        %251 = vmatpush1.msra.mxu0 %v213
        %252 = vmatprep.subr.mxu0 0.0
        %253 = vmatpush1.msra.mxu0 %v214
        %254 = vmatprep.subr.mxu0 0.0
        %255 = vmatpush1.msra.mxu0 %v215
        %256 = vmatprep.subr.mxu0 0.0
        %257 = vmatpush1.msra.mxu0 %v216
        %258 = vmatprep.subr.mxu0 0.0
        %259 = vmatpush1.msra.mxu0 %v217
        %260 = vmatprep.subr.mxu0 0.0
        %261 = vmatpush1.msra.mxu0 %v218
        %262 = vmatprep.subr.mxu0 0.0
        %263 = vmatpush1.msra.mxu0 %v219
        %264 = vmatprep.subr.mxu0 0.0
        %265 = vmatpush1.msra.mxu0 0.0
        %266 = vmatprep.subr.mxu0 0.0
        %267 = vmatpush1.msra.mxu0 0.0
        %268 = vmatprep.subr.mxu0 0.0
        %269 = vmatpush1.msra.mxu0 0.0
        %270 = vmatprep.subr.mxu0 0.0
        %271 = vmatpush1.msra.mxu0 0.0
        %272 = vmatprep.subr.mxu0 0.0
        %273 = vmatpush1.msra.mxu0 0.0
        %274 = vmatprep.subr.mxu0 0.0
        %275 = vmatpush1.msra.mxu0 0.0
        %276 = vmatprep.subr.mxu0 0.0
        %277 = vmatpush1.msra.mxu0 0.0
        %278 = vmatprep.subr.mxu0 0.0
        %279 = vmatpush1.msra.mxu0 0.0
        %280 = vmatprep.subr.mxu0 0.0
        %281 = vmatpush1.msra.mxu0 0.0
        %282 = vmatprep.subr.mxu0 0.0
        %283 = vmatpush1.msra.mxu0 0.0
        %284 = vmatprep.subr.mxu0 0.0
        %285 = vmatpush1.msra.mxu0 0.0
        %286 = vmatprep.subr.mxu0 0.0
        %287 = vmatpush1.msra.mxu0 0.0
        %288 = vmatprep.subr.mxu0 0.0
        %289 = vmatpush1.msra.mxu0 0.0
        %290 = vmatprep.subr.mxu0 0.0
        %291 = vmatpush1.msra.mxu0 0.0
        %292 = vmatprep.subr.mxu0 0.0
        %293 = vmatpush1.msra.mxu0 0.0
        %294 = vmatprep.subr.mxu0 0.0
        %295 = vmatpush1.msra.mxu0 0.0
        %296 = vmatprep.subr.mxu0 0.0
        %297 = vmatpush1.msra.mxu0 0.0
        %298 = vmatprep.subr.mxu0 0.0
        %299 = vmatpush1.msra.mxu0 0.0
        %300 = vmatprep.subr.mxu0 0.0
        %301 = vmatpush1.msra.mxu0 0.0
        %302 = vmatprep.subr.mxu0 0.0
        %303 = vmatpush1.msra.mxu0 0.0
        %304 = vmatprep.subr.mxu0 0.0
        %305 = vmatpush1.msra.mxu0 0.0
        %306 = vmatprep.subr.mxu0 0.0
        %307 = vmatpush1.msra.mxu0 0.0
        %308 = vmatprep.subr.mxu0 0.0
        %309 = vmatpush1.msra.mxu0 0.0
        %310 = vmatprep.subr.mxu0 0.0
        %311 = vmatpush1.msra.mxu0 0.0
        %312 = vmatprep.subr.mxu0 0.0
        %313 = vmatpush1.msra.mxu0 0.0
        %314 = vmatprep.mubr.f32.mxu0 0.0
        %315 = vmatmul.mubr.f32.gmra.mrb[0].mxu0 %v245
        %v316 = vpop.f32.mrb[0].mxu0
        %v317 = vadd.f32 %v242, %v316
        %v318 = vpop.f32.mrb[0].mxu0
        %319 = vmatprep.mubr.f32.mxu0 0.0
        %320 = vmatmul.mubr.f32.gmra.mrb[0].mxu0 %v248
        %v321 = vpop.f32.mrb[0].mxu0
        %v322 = vadd.f32 %v242, %v321
        %v323 = vpop.f32.mrb[0].mxu0
        %324 = vdwg.mxu0
        %vm325 = vcmask 523264
        %v326 = vsel %vm325, %v317, 0.0
        %v327 = vrot.slane %v326, 4
        %v328 = vadd.f32 %v326, %v327
        %v329 = vrot.slane %v328, 2
        %v330 = vadd.f32 %v328, %v329
        %v331 = vrot.slane %v330, 1
        %v332 = vadd.f32 %v330, %v331
        %v333 = vsel %vm325, %v322, 0.0
        %v334 = vrot.slane %v333, 4
        %v335 = vadd.f32 %v333, %v334
        %v336 = vrot.slane %v335, 2
        %v337 = vadd.f32 %v335, %v336
        %v338 = vrot.slane %v337, 1
        %v339 = vadd.f32 %v337, %v338
        %v340 = vrcp.pop 8.0
        %v341 = vmul.f32 %v332, %v340
        %v342 = vmul.f32 %v339, %v340
        %v343 = vsub.f32 %v317, %v341
        %v344 = vsub.f32 %v322, %v342
        %v345 = vmul.f32 %v343, %v343
        %v346 = vmul.f32 %v344, %v344
        %v347 = vsel %vm325, %v345, 0.0
        %v348 = vrot.slane %v347, 4
        %v349 = vadd.f32 %v347, %v348
        %v350 = vrot.slane %v349, 2
        %v351 = vadd.f32 %v349, %v350
        %v352 = vrot.slane %v351, 1
        %v353 = vadd.f32 %v351, %v352
        %v354 = vsel %vm325, %v346, 0.0
        %v355 = vrot.slane %v354, 4
        %v356 = vadd.f32 %v354, %v355
        %v357 = vrot.slane %v356, 2
        %v358 = vadd.f32 %v356, %v357
        %v359 = vrot.slane %v358, 1
        %v360 = vadd.f32 %v358, %v359
        %v361 = vmul.f32 %v353, %v340
        %v362 = vmul.f32 %v360, %v340
        %v363 = vadd.f32 %v361, 1e-05
        %v364 = vadd.f32 %v362, 1e-05
        %v365 = vrsqrt.pop %v363
        %v366 = vrsqrt.pop %v364
        %v367 = vmul.f32 %v343, %v365
        %v368 = vmul.f32 %v344, %v366
        %v369 = vlaneseq
        %v370 = vshrl.u32 %v369, 7
        %v371 = vsub.s32 0, %v370
        %v372 = vrot.slane %v233, %v371
        %v373 = vmul.f32 %v367, %v372
        %v374 = vmul.f32 %v368, %v372
        %v375 = vlaneseq
        %v376 = vshrl.u32 %v375, 7
        %v377 = vsub.s32 0, %v376
        %v378 = vrot.slane %v234, %v377
        %v379 = vadd.f32 %v373, %v378
        %v380 = vadd.f32 %v374, %v378
        %v381 = vmax.f32 %v379, 0.0
        %v382 = vmax.f32 %v380, 0.0
        %v383 = vlaneseq
        %v384 = vshrl.u32 %v383, 7
        %v385 = vsub.s32 0, %v384
        %v386 = vrot.slane %v235, %v385
        %v388 = vsel %vm325, %v381, 0
        %v391 = vsel %vm325, %v382, 0
        %393 = vmatprep.subr.mxu0 0.0
        %394 = vmatpush1.msra.mxu0 %v220
        %395 = vmatprep.subr.mxu0 0.0
        %396 = vmatpush1.msra.mxu0 %v221
        %397 = vmatprep.subr.mxu0 0.0
        %398 = vmatpush1.msra.mxu0 %v222
        %399 = vmatprep.subr.mxu0 0.0
        %400 = vmatpush1.msra.mxu0 %v223
        %401 = vmatprep.subr.mxu0 0.0
        %402 = vmatpush1.msra.mxu0 %v224
        %403 = vmatprep.subr.mxu0 0.0
        %404 = vmatpush1.msra.mxu0 %v225
        %405 = vmatprep.subr.mxu0 0.0
        %406 = vmatpush1.msra.mxu0 %v226
        %407 = vmatprep.subr.mxu0 0.0
        %408 = vmatpush1.msra.mxu0 %v227
        %409 = vmatprep.subr.mxu0 0.0
        %410 = vmatpush1.msra.mxu0 0.0
        %411 = vmatprep.subr.mxu0 0.0
        %412 = vmatpush1.msra.mxu0 0.0
        %413 = vmatprep.subr.mxu0 0.0
        %414 = vmatpush1.msra.mxu0 0.0
        %415 = vmatprep.subr.mxu0 0.0
        %416 = vmatpush1.msra.mxu0 0.0
        %417 = vmatprep.subr.mxu0 0.0
        %418 = vmatpush1.msra.mxu0 0.0
        %419 = vmatprep.subr.mxu0 0.0
        %420 = vmatpush1.msra.mxu0 0.0
        %421 = vmatprep.subr.mxu0 0.0
        %422 = vmatpush1.msra.mxu0 0.0
        %423 = vmatprep.subr.mxu0 0.0
        %424 = vmatpush1.msra.mxu0 0.0
        %425 = vmatprep.subr.mxu0 0.0
        %426 = vmatpush1.msra.mxu0 0.0
        %427 = vmatprep.subr.mxu0 0.0
        %428 = vmatpush1.msra.mxu0 0.0
        %429 = vmatprep.subr.mxu0 0.0
        %430 = vmatpush1.msra.mxu0 0.0
        %431 = vmatprep.subr.mxu0 0.0
        %432 = vmatpush1.msra.mxu0 0.0
        %433 = vmatprep.subr.mxu0 0.0
        %434 = vmatpush1.msra.mxu0 0.0
        %435 = vmatprep.subr.mxu0 0.0
        %436 = vmatpush1.msra.mxu0 0.0
        %437 = vmatprep.subr.mxu0 0.0
        %438 = vmatpush1.msra.mxu0 0.0
        %439 = vmatprep.subr.mxu0 0.0
        %440 = vmatpush1.msra.mxu0 0.0
        %441 = vmatprep.subr.mxu0 0.0
        %442 = vmatpush1.msra.mxu0 0.0
        %443 = vmatprep.subr.mxu0 0.0
        %444 = vmatpush1.msra.mxu0 0.0
        %445 = vmatprep.subr.mxu0 0.0
        %446 = vmatpush1.msra.mxu0 0.0
        %447 = vmatprep.subr.mxu0 0.0
        %448 = vmatpush1.msra.mxu0 0.0
        %449 = vmatprep.subr.mxu0 0.0
        %450 = vmatpush1.msra.mxu0 0.0
        %451 = vmatprep.subr.mxu0 0.0
        %452 = vmatpush1.msra.mxu0 0.0
        %453 = vmatprep.subr.mxu0 0.0
        %454 = vmatpush1.msra.mxu0 0.0
        %455 = vmatprep.subr.mxu0 0.0
        %456 = vmatpush1.msra.mxu0 0.0
        %457 = vmatprep.mubr.f32.mxu0 0.0
        %458 = vmatmul.mubr.f32.gmra.mrb[0].mxu0 %v388
        %v459 = vpop.f32.mrb[0].mxu0
        %v460 = vadd.f32 %v386, %v459
        %v461 = vpop.f32.mrb[0].mxu0
        %462 = vmatprep.mubr.f32.mxu0 0.0
        %463 = vmatmul.mubr.f32.gmra.mrb[0].mxu0 %v391
        %v464 = vpop.f32.mrb[0].mxu0
        %v465 = vadd.f32 %v386, %v464
        %v466 = vpop.f32.mrb[0].mxu0
        %467 = vdwg.mxu0
        %v468 = vlaneseq
        %v469 = vshrl.u32 %v468, 7
        %v470 = vsub.s32 0, %v469
        %v471 = vrot.slane %v236, %v470
        %vm472 = vcmask 261120
        %v474 = vsel %vm472, %v460, 0
        %v477 = vsel %vm472, %v465, 0
        %479 = vmatprep.subr.mxu0 0.0
        %480 = vmatpush1.msra.mxu0 %v228
        %481 = vmatprep.subr.mxu0 0.0
        %482 = vmatpush1.msra.mxu0 %v229
        %483 = vmatprep.subr.mxu0 0.0
        %484 = vmatpush1.msra.mxu0 %v230
        %485 = vmatprep.subr.mxu0 0.0
        %486 = vmatpush1.msra.mxu0 %v231
        %487 = vmatprep.subr.mxu0 0.0
        %488 = vmatpush1.msra.mxu0 0.0
        %489 = vmatprep.subr.mxu0 0.0
        %490 = vmatpush1.msra.mxu0 0.0
        %491 = vmatprep.subr.mxu0 0.0
        %492 = vmatpush1.msra.mxu0 0.0
        %493 = vmatprep.subr.mxu0 0.0
        %494 = vmatpush1.msra.mxu0 0.0
        %495 = vmatprep.subr.mxu0 0.0
        %496 = vmatpush1.msra.mxu0 0.0
        %497 = vmatprep.subr.mxu0 0.0
        %498 = vmatpush1.msra.mxu0 0.0
        %499 = vmatprep.subr.mxu0 0.0
        %500 = vmatpush1.msra.mxu0 0.0
        %501 = vmatprep.subr.mxu0 0.0
        %502 = vmatpush1.msra.mxu0 0.0
        %503 = vmatprep.subr.mxu0 0.0
        %504 = vmatpush1.msra.mxu0 0.0
        %505 = vmatprep.subr.mxu0 0.0
        %506 = vmatpush1.msra.mxu0 0.0
        %507 = vmatprep.subr.mxu0 0.0
        %508 = vmatpush1.msra.mxu0 0.0
        %509 = vmatprep.subr.mxu0 0.0
        %510 = vmatpush1.msra.mxu0 0.0
        %511 = vmatprep.subr.mxu0 0.0
        %512 = vmatpush1.msra.mxu0 0.0
        %513 = vmatprep.subr.mxu0 0.0
        %514 = vmatpush1.msra.mxu0 0.0
        %515 = vmatprep.subr.mxu0 0.0
        %516 = vmatpush1.msra.mxu0 0.0
        %517 = vmatprep.subr.mxu0 0.0
        %518 = vmatpush1.msra.mxu0 0.0
        %519 = vmatprep.subr.mxu0 0.0
        %520 = vmatpush1.msra.mxu0 0.0
        %521 = vmatprep.subr.mxu0 0.0
        %522 = vmatpush1.msra.mxu0 0.0
        %523 = vmatprep.subr.mxu0 0.0
        %524 = vmatpush1.msra.mxu0 0.0
        %525 = vmatprep.subr.mxu0 0.0
        %526 = vmatpush1.msra.mxu0 0.0
        %527 = vmatprep.subr.mxu0 0.0
        %528 = vmatpush1.msra.mxu0 0.0
        %529 = vmatprep.subr.mxu0 0.0
        %530 = vmatpush1.msra.mxu0 0.0
        %531 = vmatprep.subr.mxu0 0.0
        %532 = vmatpush1.msra.mxu0 0.0
        %533 = vmatprep.subr.mxu0 0.0
        %534 = vmatpush1.msra.mxu0 0.0
        %535 = vmatprep.subr.mxu0 0.0
        %536 = vmatpush1.msra.mxu0 0.0
        %537 = vmatprep.subr.mxu0 0.0
        %538 = vmatpush1.msra.mxu0 0.0
        %539 = vmatprep.subr.mxu0 0.0
        %540 = vmatpush1.msra.mxu0 0.0
        %541 = vmatprep.subr.mxu0 0.0
        %542 = vmatpush1.msra.mxu0 0.0
        %543 = vmatprep.mubr.f32.mxu0 0.0
        %544 = vmatmul.mubr.f32.gmra.mrb[0].mxu0 %v474
        %v545 = vpop.f32.mrb[0].mxu0
        %v546 = vadd.f32 %v471, %v545
        %v547 = vpop.f32.mrb[0].mxu0
        %548 = vmatprep.mubr.f32.mxu0 0.0
        %549 = vmatmul.mubr.f32.gmra.mrb[0].mxu0 %v477
        %v550 = vpop.f32.mrb[0].mxu0
        %v551 = vadd.f32 %v471, %v550
        %v552 = vpop.f32.mrb[0].mxu0
        %553 = vdwg.mxu0
        %v554 = vxor.u32 %v546, 2147483648
        %v555 = vxor.u32 %v551, 2147483648
        %v556 = vmul.f32 %v554, 1.442695
        %v557 = vpow.pop %v556
        %v558 = vmul.f32 %v555, 1.442695
        %v559 = vpow.pop %v558
        %v560 = vadd.f32 %v557, 1.0
        %v561 = vadd.f32 %v559, 1.0
        %v562 = vrcp.pop %v560
        %v563 = vmul.f32 1.0, %v562
        %v564 = vrcp.pop %v561
        %v565 = vmul.f32 1.0, %v564
        %568 = vrot.lane.b32.xlu0 %v546, 32
        %v569 = vpop.permute.xlu0 %568
        %570 = vrot.lane.b32.xlu0 %v551, 32
        %v571 = vpop.permute.xlu0 %570
        %v574 = vsel %vm472, %v460, %v569
        %v575 = vsel %vm472, %v465, %v571
        %v576 = vsel %vm325, %v574, 0.0
        %v577 = vsel %vm325, %v575, 0.0
        %578 = vst [vmem:[%s195] sm:$0xff] %v576
        %579 = vst [vmem:[%s195 + $0x8] sm:$0xff] %v577
        %v580 = vlaneseq
        %v581 = vshrl.u32 %v580, 7
        %v582 = vadd.s32 %v581, 8
        %v583 = vlaneseq
        %v584 = vand.u32 %v583, 127
        %vm585 = vcmp.eq.s32.totalorder %v581, %v584
        %vm586 = vcmp.eq.s32.totalorder %v582, %v584
        %v587 = vsub.f32 %v211, %v563
        %v588 = vmul.f32 %v587, %v587
        %590 = vrot.lane.b32.xlu0 %v588, 96
        %v591 = vpop.permute.xlu0 %590
        %vm593 = vcmask 162816
        %v594 = vsel %vm593, %v591, 0.0
        %595 = vadd.xlane.f32.xlu0 %v594
        %v596 = vpop.xlane.xlu0 %595
        %v597 = vrot.slane %v596, 4
        %v598 = vadd.f32 %v596, %v597
        %v599 = vrot.slane %v598, 2
        %v600 = vadd.f32 %v598, %v599
        %v601 = vrot.slane %v600, 1
        %v602 = vadd.f32 %v600, %v601
        %s603 = vtos %v602
        %v604 = vstv %s603
        %v605 = vrcp.pop 160.0
        %v606 = vmul.f32 %v604, %v605
        %v607 = vsub.f32 %v211, %v546
        %v608 = vmul.f32 %v607, %v607
        %v609 = vsel %vm472, %v608, 0.0
        %610 = vadd.xlane.f32.xlu0 %v609
        %v611 = vpop.xlane.xlu0 %610
        %v612 = vrot.slane %v611, 4
        %v613 = vadd.f32 %v611, %v612
        %v614 = vrot.slane %v613, 2
        %v615 = vadd.f32 %v613, %v614
        %v616 = vrot.slane %v615, 1
        %v617 = vadd.f32 %v615, %v616
        %s618 = vtos %v617
        %v619 = vstv %s618
        %v620 = vrcp.pop 256.0
        %v621 = vmul.f32 %v619, %v620
        %vm622 = vcmask 130048
        %v623 = vsel %vm622, %v460, 0.0
        %v624 = vrot.slane %v623, 4
        %v625 = vadd.f32 %v623, %v624
        %v626 = vrot.slane %v625, 2
        %v627 = vadd.f32 %v625, %v626
        %v628 = vrot.slane %v627, 1
        %v629 = vadd.f32 %v627, %v628
        %v630 = vmul.f32 %v629, %v340
        %v631 = vsub.f32 %v460, %v630
        %v632 = vmul.f32 %v631, %v631
        %v633 = vsel %vm622, %v632, 0.0
        %v634 = vrot.slane %v633, 4
        %v635 = vadd.f32 %v633, %v634
        %v636 = vrot.slane %v635, 2
        %v637 = vadd.f32 %v635, %v636
        %v638 = vrot.slane %v637, 1
        %v639 = vadd.f32 %v637, %v638
        %v640 = vmul.f32 %v639, %v340
        %v641 = vadd.f32 %v640, 1e-05
        %v642 = vrsqrt.pop %v641
        %v643 = vmul.f32 %v631, %v642
        %v644 = vlaneseq
        %v645 = vshrl.u32 %v644, 7
        %v646 = vsub.s32 0, %v645
        %v647 = vrot.slane %v237, %v646
        %v648 = vmul.f32 %v643, %v647
        %v649 = vlaneseq
        %v650 = vshrl.u32 %v649, 7
        %v651 = vsub.s32 0, %v650
        %v652 = vrot.slane %v238, %v651
        %v653 = vadd.f32 %v648, %v652
        %vm654 = vcmask 261248
        %v655 = vsel %vm654, %v460, 0.0
        %v656 = vrot.slane %v655, 4
        %v657 = vadd.f32 %v655, %v656
        %v658 = vrot.slane %v657, 2
        %v659 = vadd.f32 %v657, %v658
        %v660 = vrot.slane %v659, 1
        %v661 = vadd.f32 %v659, %v660
        %v662 = vmul.f32 %v661, %v340
        %v663 = vsub.f32 %v460, %v662
        %v664 = vmul.f32 %v663, %v663
        %v665 = vsel %vm654, %v664, 0.0
        %v666 = vrot.slane %v665, 4
        %v667 = vadd.f32 %v665, %v666
        %v668 = vrot.slane %v667, 2
        %v669 = vadd.f32 %v667, %v668
        %v670 = vrot.slane %v669, 1
        %v671 = vadd.f32 %v669, %v670
        %v672 = vmul.f32 %v671, %v340
        %v673 = vadd.f32 %v672, 1e-05
        %v674 = vrsqrt.pop %v673
        %v675 = vmul.f32 %v663, %v674
        %677 = vrot.lane.b32.xlu0 %v647, 16
        %v678 = vpop.permute.xlu0 %677
        %v680 = vmul.f32 %v675, %v678
        %682 = vrot.lane.b32.xlu0 %v652, 16
        %v683 = vpop.permute.xlu0 %682
        %v685 = vadd.f32 %v680, %v683
        %686 = vxpose.xlu0.b32.start [1/16] %v653, 128
        %687 = vxpose.xlu0.b32.cont [2/16] 0.0, 128
        %688 = vxpose.xlu0.b32.cont [3/16] 0.0, 128
        %689 = vxpose.xlu0.b32.cont [4/16] 0.0, 128
        %690 = vxpose.xlu0.b32.cont [5/16] 0.0, 128
        %691 = vxpose.xlu0.b32.cont [6/16] 0.0, 128
        %692 = vxpose.xlu0.b32.cont [7/16] 0.0, 128
        %693 = vxpose.xlu0.b32.cont [8/16] 0.0, 128
        %694 = vxpose.xlu0.b32.cont [9/16] 0.0, 128
        %695 = vxpose.xlu0.b32.cont [10/16] 0.0, 128
        %696 = vxpose.xlu0.b32.cont [11/16] 0.0, 128
        %697 = vxpose.xlu0.b32.cont [12/16] 0.0, 128
        %698 = vxpose.xlu0.b32.cont [13/16] 0.0, 128
        %699 = vxpose.xlu0.b32.cont [14/16] 0.0, 128
        %700 = vxpose.xlu0.b32.cont [15/16] 0.0, 128
        %701 = vxpose.xlu0.b32.end [16/16] 0.0, 128
        %v702 = vpop.trf.xlu0
        %v703 = vpop.trf.xlu0
        %v704 = vpop.trf.xlu0
        %v705 = vpop.trf.xlu0
        %v706 = vpop.trf.xlu0
        %v707 = vpop.trf.xlu0
        %v708 = vpop.trf.xlu0
        %v709 = vpop.trf.xlu0
        %v710 = vpop.trf.xlu0
        %v711 = vpop.trf.xlu0
        %v712 = vpop.trf.xlu0
        %v713 = vpop.trf.xlu0
        %v714 = vpop.trf.xlu0
        %v715 = vpop.trf.xlu0
        %v716 = vpop.trf.xlu0
        %v717 = vpop.trf.xlu0
        %719 = vrot.lane.b32.xlu0 %v685, 112
        %v720 = vpop.permute.xlu0 %719
        %vm722 = vcmask 64512
        %v724 = vsel %vm722, %v702, 0
        %v727 = vsel %vm722, %v703, 0
        %729 = vmatprep.subr.mxu0 0.0
        %730 = vmatpush1.msra.mxu0 %v720
        %731 = vmatprep.subr.mxu0 0.0
        %732 = vmatpush1.msra.mxu0 0.0
        %733 = vmatprep.subr.mxu0 0.0
        %734 = vmatpush1.msra.mxu0 0.0
        %735 = vmatprep.subr.mxu0 0.0
        %736 = vmatpush1.msra.mxu0 0.0
        %737 = vmatprep.subr.mxu0 0.0
        %738 = vmatpush1.msra.mxu0 0.0
        %739 = vmatprep.subr.mxu0 0.0
        %740 = vmatpush1.msra.mxu0 0.0
        %741 = vmatprep.subr.mxu0 0.0
        %742 = vmatpush1.msra.mxu0 0.0
        %743 = vmatprep.subr.mxu0 0.0
        %744 = vmatpush1.msra.mxu0 0.0
        %745 = vmatprep.subr.mxu0 0.0
        %746 = vmatpush1.msra.mxu0 0.0
        %747 = vmatprep.subr.mxu0 0.0
        %748 = vmatpush1.msra.mxu0 0.0
        %749 = vmatprep.subr.mxu0 0.0
        %750 = vmatpush1.msra.mxu0 0.0
        %751 = vmatprep.subr.mxu0 0.0
        %752 = vmatpush1.msra.mxu0 0.0
        %753 = vmatprep.subr.mxu0 0.0
        %754 = vmatpush1.msra.mxu0 0.0
        %755 = vmatprep.subr.mxu0 0.0
        %756 = vmatpush1.msra.mxu0 0.0
        %757 = vmatprep.subr.mxu0 0.0
        %758 = vmatpush1.msra.mxu0 0.0
        %759 = vmatprep.subr.mxu0 0.0
        %760 = vmatpush1.msra.mxu0 0.0
        %761 = vmatprep.subr.mxu0 0.0
        %762 = vmatpush1.msra.mxu0 0.0
        %763 = vmatprep.subr.mxu0 0.0
        %764 = vmatpush1.msra.mxu0 0.0
        %765 = vmatprep.subr.mxu0 0.0
        %766 = vmatpush1.msra.mxu0 0.0
        %767 = vmatprep.subr.mxu0 0.0
        %768 = vmatpush1.msra.mxu0 0.0
        %769 = vmatprep.subr.mxu0 0.0
        %770 = vmatpush1.msra.mxu0 0.0
        %771 = vmatprep.subr.mxu0 0.0
        %772 = vmatpush1.msra.mxu0 0.0
        %773 = vmatprep.subr.mxu0 0.0
        %774 = vmatpush1.msra.mxu0 0.0
        %775 = vmatprep.subr.mxu0 0.0
        %776 = vmatpush1.msra.mxu0 0.0
        %777 = vmatprep.subr.mxu0 0.0
        %778 = vmatpush1.msra.mxu0 0.0
        %779 = vmatprep.subr.mxu0 0.0
        %780 = vmatpush1.msra.mxu0 0.0
        %781 = vmatprep.subr.mxu0 0.0
        %782 = vmatpush1.msra.mxu0 0.0
        %783 = vmatprep.subr.mxu0 0.0
        %784 = vmatpush1.msra.mxu0 0.0
        %785 = vmatprep.subr.mxu0 0.0
        %786 = vmatpush1.msra.mxu0 0.0
        %787 = vmatprep.subr.mxu0 0.0
        %788 = vmatpush1.msra.mxu0 0.0
        %789 = vmatprep.subr.mxu0 0.0
        %790 = vmatpush1.msra.mxu0 0.0
        %791 = vmatprep.subr.mxu0 0.0
        %792 = vmatpush1.msra.mxu0 0.0
        %793 = vmatprep.mubr.f32.mxu0 0.0
        %794 = vmatmul.mubr.f32.gmra.mrb[0].mxu0 %v724
        %v795 = vpop.f32.mrb[0].mxu0
        %v796 = vadd.f32 0.0, %v795
        %v797 = vpop.f32.mrb[0].mxu0
        %798 = vmatprep.mubr.f32.mxu0 0.0
        %799 = vmatmul.mubr.f32.gmra.mrb[0].mxu0 %v727
        %v800 = vpop.f32.mrb[0].mxu0
        %v801 = vadd.f32 0.0, %v800
        %v802 = vpop.f32.mrb[0].mxu0
        %803 = vdwg.mxu0
        %v804 = vmul.f32 %v796, %v340
        %v805 = vmul.f32 %v801, %v340
        %v806 = vsub.f32 %v804, 1.0
        %v807 = vsub.f32 %v805, 1.0
        %v808 = vmul.f32 %v806, %v806
        %v809 = vmul.f32 %v807, %v807
        %v810 = vsel %vm585, %v808, 0.0
        %v811 = vsel %vm586, %v809, 0.0
        %v812 = vsel %vm622, %v810, 0.0
        %v813 = vsel %vm622, %v811, 0.0
        %v814 = vadd.f32 %v812, %v813
        %815 = vadd.xlane.f32.xlu0 %v814
        %v816 = vpop.xlane.xlu0 %815
        %v817 = vrot.slane %v816, 4
        %v818 = vadd.f32 %v816, %v817
        %v819 = vrot.slane %v818, 2
        %v820 = vadd.f32 %v818, %v819
        %v821 = vrot.slane %v820, 1
        %v822 = vadd.f32 %v820, %v821
        %s823 = vtos %v822
        %v824 = vstv %s823
        %v825 = vmul.f32 %v804, %v804
        %v826 = vmul.f32 %v805, %v805
        %v827 = vsel %vm585, 0.0, %v825
        %v828 = vsel %vm586, 0.0, %v826
        %v829 = vsel %vm622, %v827, 0.0
        %v830 = vsel %vm622, %v828, 0.0
        %v831 = vadd.f32 %v829, %v830
        %832 = vadd.xlane.f32.xlu0 %v831
        %v833 = vpop.xlane.xlu0 %832
        %v834 = vrot.slane %v833, 4
        %v835 = vadd.f32 %v833, %v834
        %v836 = vrot.slane %v835, 2
        %v837 = vadd.f32 %v835, %v836
        %v838 = vrot.slane %v837, 1
        %v839 = vadd.f32 %v837, %v838
        %s840 = vtos %v839
        %v841 = vstv %s840
        %v842 = vmul.f32 %v841, 0.0051
        %v843 = vadd.f32 %v824, %v842
        %v844 = vadd.f32 %v606, %v621
        %v845 = vadd.f32 %v844, %v843
        %vm846 = vcmask 7168
        %v847 = vsel %vm846, %v606, %v621
        %vm848 = vcmask 15360
        %v849 = vsel %vm848, %v847, %v843
        %vm850 = vcmask 23552
        %v851 = vsel %vm850, %v849, %v845
        %vm852 = vcmask 24576
        %853 = vst.msk [vmem:[%s202] sm:$0x1] %vm852, %v851
        %v854 = vsub.f32 %v212, %v565
        %v855 = vmul.f32 %v854, %v854
        %857 = vrot.lane.b32.xlu0 %v855, 96
        %v858 = vpop.permute.xlu0 %857
        %v860 = vsel %vm593, %v858, 0.0
        %861 = vadd.xlane.f32.xlu0 %v860
        %v862 = vpop.xlane.xlu0 %861
        %v863 = vrot.slane %v862, 4
        %v864 = vadd.f32 %v862, %v863
        %v865 = vrot.slane %v864, 2
        %v866 = vadd.f32 %v864, %v865
        %v867 = vrot.slane %v866, 1
        %v868 = vadd.f32 %v866, %v867
        %s869 = vtos %v868
        %v870 = vstv %s869
        %v871 = vmul.f32 %v870, %v605
        %v872 = vsub.f32 %v212, %v551
        %v873 = vmul.f32 %v872, %v872
        %v874 = vsel %vm472, %v873, 0.0
        %875 = vadd.xlane.f32.xlu0 %v874
        %v876 = vpop.xlane.xlu0 %875
        %v877 = vrot.slane %v876, 4
        %v878 = vadd.f32 %v876, %v877
        %v879 = vrot.slane %v878, 2
        %v880 = vadd.f32 %v878, %v879
        %v881 = vrot.slane %v880, 1
        %v882 = vadd.f32 %v880, %v881
        %s883 = vtos %v882
        %v884 = vstv %s883
        %v885 = vmul.f32 %v884, %v620
        %v886 = vsel %vm622, %v465, 0.0
        %v887 = vrot.slane %v886, 4
        %v888 = vadd.f32 %v886, %v887
        %v889 = vrot.slane %v888, 2
        %v890 = vadd.f32 %v888, %v889
        %v891 = vrot.slane %v890, 1
        %v892 = vadd.f32 %v890, %v891
        %v893 = vmul.f32 %v892, %v340
        %v894 = vsub.f32 %v465, %v893
        %v895 = vmul.f32 %v894, %v894
        %v896 = vsel %vm622, %v895, 0.0
        %v897 = vrot.slane %v896, 4
        %v898 = vadd.f32 %v896, %v897
        %v899 = vrot.slane %v898, 2
        %v900 = vadd.f32 %v898, %v899
        %v901 = vrot.slane %v900, 1
        %v902 = vadd.f32 %v900, %v901
        %v903 = vmul.f32 %v902, %v340
        %v904 = vadd.f32 %v903, 1e-05
        %v905 = vrsqrt.pop %v904
        %v906 = vmul.f32 %v894, %v905
        %v907 = vmul.f32 %v906, %v647
        %v908 = vadd.f32 %v907, %v652
        %v909 = vsel %vm654, %v465, 0.0
        %v910 = vrot.slane %v909, 4
        %v911 = vadd.f32 %v909, %v910
        %v912 = vrot.slane %v911, 2
        %v913 = vadd.f32 %v911, %v912
        %v914 = vrot.slane %v913, 1
        %v915 = vadd.f32 %v913, %v914
        %v916 = vmul.f32 %v915, %v340
        %v917 = vsub.f32 %v465, %v916
        %v918 = vmul.f32 %v917, %v917
        %v919 = vsel %vm654, %v918, 0.0
        %v920 = vrot.slane %v919, 4
        %v921 = vadd.f32 %v919, %v920
        %v922 = vrot.slane %v921, 2
        %v923 = vadd.f32 %v921, %v922
        %v924 = vrot.slane %v923, 1
        %v925 = vadd.f32 %v923, %v924
        %v926 = vmul.f32 %v925, %v340
        %v927 = vadd.f32 %v926, 1e-05
        %v928 = vrsqrt.pop %v927
        %v929 = vmul.f32 %v917, %v928
        %v930 = vmul.f32 %v929, %v678
        %v931 = vadd.f32 %v930, %v683
        %932 = vxpose.xlu0.b32.start [1/16] %v908, 128
        %933 = vxpose.xlu0.b32.cont [2/16] 0.0, 128
        %934 = vxpose.xlu0.b32.cont [3/16] 0.0, 128
        %935 = vxpose.xlu0.b32.cont [4/16] 0.0, 128
        %936 = vxpose.xlu0.b32.cont [5/16] 0.0, 128
        %937 = vxpose.xlu0.b32.cont [6/16] 0.0, 128
        %938 = vxpose.xlu0.b32.cont [7/16] 0.0, 128
        %939 = vxpose.xlu0.b32.cont [8/16] 0.0, 128
        %940 = vxpose.xlu0.b32.cont [9/16] 0.0, 128
        %941 = vxpose.xlu0.b32.cont [10/16] 0.0, 128
        %942 = vxpose.xlu0.b32.cont [11/16] 0.0, 128
        %943 = vxpose.xlu0.b32.cont [12/16] 0.0, 128
        %944 = vxpose.xlu0.b32.cont [13/16] 0.0, 128
        %945 = vxpose.xlu0.b32.cont [14/16] 0.0, 128
        %946 = vxpose.xlu0.b32.cont [15/16] 0.0, 128
        %947 = vxpose.xlu0.b32.end [16/16] 0.0, 128
        %v948 = vpop.trf.xlu0
        %v949 = vpop.trf.xlu0
        %v950 = vpop.trf.xlu0
        %v951 = vpop.trf.xlu0
        %v952 = vpop.trf.xlu0
        %v953 = vpop.trf.xlu0
        %v954 = vpop.trf.xlu0
        %v955 = vpop.trf.xlu0
        %v956 = vpop.trf.xlu0
        %v957 = vpop.trf.xlu0
        %v958 = vpop.trf.xlu0
        %v959 = vpop.trf.xlu0
        %v960 = vpop.trf.xlu0
        %v961 = vpop.trf.xlu0
        %v962 = vpop.trf.xlu0
        %v963 = vpop.trf.xlu0
        %965 = vrot.lane.b32.xlu0 %v931, 112
        %v966 = vpop.permute.xlu0 %965
        %v969 = vsel %vm722, %v948, 0
        %v972 = vsel %vm722, %v949, 0
        %974 = vmatprep.subr.mxu0 0.0
        %975 = vmatpush1.msra.mxu0 %v966
        %976 = vmatprep.subr.mxu0 0.0
        %977 = vmatpush1.msra.mxu0 0.0
        %978 = vmatprep.subr.mxu0 0.0
        %979 = vmatpush1.msra.mxu0 0.0
        %980 = vmatprep.subr.mxu0 0.0
        %981 = vmatpush1.msra.mxu0 0.0
        %982 = vmatprep.subr.mxu0 0.0
        %983 = vmatpush1.msra.mxu0 0.0
        %984 = vmatprep.subr.mxu0 0.0
        %985 = vmatpush1.msra.mxu0 0.0
        %986 = vmatprep.subr.mxu0 0.0
        %987 = vmatpush1.msra.mxu0 0.0
        %988 = vmatprep.subr.mxu0 0.0
        %989 = vmatpush1.msra.mxu0 0.0
        %990 = vmatprep.subr.mxu0 0.0
        %991 = vmatpush1.msra.mxu0 0.0
        %992 = vmatprep.subr.mxu0 0.0
        %993 = vmatpush1.msra.mxu0 0.0
        %994 = vmatprep.subr.mxu0 0.0
        %995 = vmatpush1.msra.mxu0 0.0
        %996 = vmatprep.subr.mxu0 0.0
        %997 = vmatpush1.msra.mxu0 0.0
        %998 = vmatprep.subr.mxu0 0.0
        %999 = vmatpush1.msra.mxu0 0.0
        %1000 = vmatprep.subr.mxu0 0.0
        %1001 = vmatpush1.msra.mxu0 0.0
        %1002 = vmatprep.subr.mxu0 0.0
        %1003 = vmatpush1.msra.mxu0 0.0
        %1004 = vmatprep.subr.mxu0 0.0
        %1005 = vmatpush1.msra.mxu0 0.0
        %1006 = vmatprep.subr.mxu0 0.0
        %1007 = vmatpush1.msra.mxu0 0.0
        %1008 = vmatprep.subr.mxu0 0.0
        %1009 = vmatpush1.msra.mxu0 0.0
        %1010 = vmatprep.subr.mxu0 0.0
        %1011 = vmatpush1.msra.mxu0 0.0
        %1012 = vmatprep.subr.mxu0 0.0
        %1013 = vmatpush1.msra.mxu0 0.0
        %1014 = vmatprep.subr.mxu0 0.0
        %1015 = vmatpush1.msra.mxu0 0.0
        %1016 = vmatprep.subr.mxu0 0.0
        %1017 = vmatpush1.msra.mxu0 0.0
        %1018 = vmatprep.subr.mxu0 0.0
        %1019 = vmatpush1.msra.mxu0 0.0
        %1020 = vmatprep.subr.mxu0 0.0
        %1021 = vmatpush1.msra.mxu0 0.0
        %1022 = vmatprep.subr.mxu0 0.0
        %1023 = vmatpush1.msra.mxu0 0.0
        %1024 = vmatprep.subr.mxu0 0.0
        %1025 = vmatpush1.msra.mxu0 0.0
        %1026 = vmatprep.subr.mxu0 0.0
        %1027 = vmatpush1.msra.mxu0 0.0
        %1028 = vmatprep.subr.mxu0 0.0
        %1029 = vmatpush1.msra.mxu0 0.0
        %1030 = vmatprep.subr.mxu0 0.0
        %1031 = vmatpush1.msra.mxu0 0.0
        %1032 = vmatprep.subr.mxu0 0.0
        %1033 = vmatpush1.msra.mxu0 0.0
        %1034 = vmatprep.subr.mxu0 0.0
        %1035 = vmatpush1.msra.mxu0 0.0
        %1036 = vmatprep.subr.mxu0 0.0
        %1037 = vmatpush1.msra.mxu0 0.0
        %1038 = vmatprep.mubr.f32.mxu0 0.0
        %1039 = vmatmul.mubr.f32.gmra.mrb[0].mxu0 %v969
        %v1040 = vpop.f32.mrb[0].mxu0
        %v1041 = vadd.f32 0.0, %v1040
        %v1042 = vpop.f32.mrb[0].mxu0
        %1043 = vmatprep.mubr.f32.mxu0 0.0
        %1044 = vmatmul.mubr.f32.gmra.mrb[0].mxu0 %v972
        %v1045 = vpop.f32.mrb[0].mxu0
        %v1046 = vadd.f32 0.0, %v1045
        %v1047 = vpop.f32.mrb[0].mxu0
        %1048 = vdwg.mxu0
        %v1049 = vmul.f32 %v1041, %v340
        %v1050 = vmul.f32 %v1046, %v340
        %v1051 = vsub.f32 %v1049, 1.0
        %v1052 = vsub.f32 %v1050, 1.0
        %v1053 = vmul.f32 %v1051, %v1051
        %v1054 = vmul.f32 %v1052, %v1052
        %v1055 = vsel %vm585, %v1053, 0.0
        %v1056 = vsel %vm586, %v1054, 0.0
        %v1057 = vsel %vm622, %v1055, 0.0
        %v1058 = vsel %vm622, %v1056, 0.0
        %v1059 = vadd.f32 %v1057, %v1058
        %1060 = vadd.xlane.f32.xlu0 %v1059
        %v1061 = vpop.xlane.xlu0 %1060
        %v1062 = vrot.slane %v1061, 4
        %v1063 = vadd.f32 %v1061, %v1062
        %v1064 = vrot.slane %v1063, 2
        %v1065 = vadd.f32 %v1063, %v1064
        %v1066 = vrot.slane %v1065, 1
        %v1067 = vadd.f32 %v1065, %v1066
        %s1068 = vtos %v1067
        %v1069 = vstv %s1068
        %v1070 = vmul.f32 %v1049, %v1049
        %v1071 = vmul.f32 %v1050, %v1050
        %v1072 = vsel %vm585, 0.0, %v1070
        %v1073 = vsel %vm586, 0.0, %v1071
        %v1074 = vsel %vm622, %v1072, 0.0
        %v1075 = vsel %vm622, %v1073, 0.0
        %v1076 = vadd.f32 %v1074, %v1075
        %1077 = vadd.xlane.f32.xlu0 %v1076
        %v1078 = vpop.xlane.xlu0 %1077
        %v1079 = vrot.slane %v1078, 4
        %v1080 = vadd.f32 %v1078, %v1079
        %v1081 = vrot.slane %v1080, 2
        %v1082 = vadd.f32 %v1080, %v1081
        %v1083 = vrot.slane %v1082, 1
        %v1084 = vadd.f32 %v1082, %v1083
        %s1085 = vtos %v1084
        %v1086 = vstv %s1085
        %v1087 = vmul.f32 %v1086, 0.0051
        %v1088 = vadd.f32 %v1069, %v1087
        %v1089 = vadd.f32 %v871, %v885
        %v1090 = vadd.f32 %v1089, %v1088
        %v1091 = vsel %vm846, %v871, %v885
        %v1092 = vsel %vm848, %v1091, %v1088
        %v1093 = vsel %vm850, %v1092, %v1090
        %s1094 = scalar_lea.vmem %s202, 1 [#allocation4]
        %1095 = vst.msk [vmem:[%s1094] sm:$0x1] %vm852, %v1093
        %s1096 = sand.u32 %s98, 1
        %s1097 = scalar_lea.sflag [#allocation3], %s1096
        %s1098 = sand.u32 %s98, 1
        %s1099 = smul.addr %s1098, 16
        %s1100 = scalar_lea.vmem [#allocation2], %s1099
        %s1101 = sand.u32 %s124, 1
        %s1102 = scalar_lea.sflag [#allocation5], %s1101
        %s1103 = sand.u32 %s124, 1
        %s1104 = smul.addr %s1103, 2
        %s1105 = scalar_lea.vmem [#allocation4], %s1104
        // Predicated region
        $region33: #{tpu_custom_call.1} parent=31 // pred_check
          %p1106 = pneg %p108
        $region34: #{tpu_custom_call.1} parent=31 // pred_check_branch
          %1108 = sbr.rel (%p1106) target = $region36
        $region35: #{tpu_custom_call.1} parent=31 // pred_region
          %s1109 = smul.u32 2, %s22
          %s1111 = ssub.s32 256, 256
          %1112 = vsyncadd %s1097, %s1111
          %s1113 = smul.addr %s1109, 128
          %s1114 = scalar_lea.hbm %s3, %s1113
          %s1115 = sshll.u32 %s1100, 4
          %s1116 = int_to_ptr.vmem [resolvable:$true] %s1115
          %1121 = dma.vmem_to_hbm [thread:$0]  %s1116, 256, %s1114, %s1097, 128, 128, 8
        $region36: #{tpu_custom_call.1} parent=31 // pred_fallthru
          _
        // Predicated region
        $region37: #{tpu_custom_call.1} parent=31 // pred_check
          %p1122 = pneg %p134
        $region38: #{tpu_custom_call.1} parent=31 // pred_check_branch
          %1124 = sbr.rel (%p1122) target = $region40
        $region39: #{tpu_custom_call.1} parent=31 // pred_region
          %s1125 = smul.u32 2, %s22
          %s1127 = ssub.s32 32, 32
          %1128 = vsyncadd %s1102, %s1127
          %s1129 = smul.addr %s1125, 16
          %s1130 = scalar_lea.hbm %s4, %s1129
          %s1131 = sshll.u32 %s1105, 4
          %s1132 = int_to_ptr.vmem [resolvable:$true] %s1131
          %1137 = dma.vmem_to_hbm [thread:$0]  %s1132, 32, %s1130, %s1102, 16, 16, 1
        $region40: #{tpu_custom_call.1} parent=31 // pred_fallthru
          _
      $region32: #{tpu_custom_call.1} parent=5 // pred_fallthru
        _
      %p1138 = scmp.le.s32.totalorder 2, %s17
      // Predicated region
      $region41: #{tpu_custom_call.1} parent=5 // pred_check
        %p1139 = pneg %p1138
      $region42: #{tpu_custom_call.1} parent=5 // pred_check_branch
        %1141 = sbr.rel (%p1139) target = $region44
      $region43: #{tpu_custom_call.1} parent=5 // pred_region
        %s1142 = ssub.s32 %s17, 2
        // Predicated region
        $region45: #{tpu_custom_call.1} parent=43 // pred_check
          %p1143 = pneg %p114
        $region46: #{tpu_custom_call.1} parent=43 // pred_check_branch
          %1145 = sbr.rel (%p1143) target = $region48
        $region47: #{tpu_custom_call.1} parent=43 // pred_region
          %s1146 = sand.u32 %s99, 1
          %s1147 = scalar_lea.sflag [#allocation3], %s1146
          %s1148 = sand.u32 %s99, 1
          %s1149 = smul.addr %s1148, 16
          %s1150 = scalar_lea.vmem [#allocation2], %s1149
          %1151 = dma.done %s1147, 256
        $region48: #{tpu_custom_call.1} parent=43 // pred_fallthru
          _
        // Predicated region
        $region49: #{tpu_custom_call.1} parent=43 // pred_check
          %p1152 = pneg %p140
        $region50: #{tpu_custom_call.1} parent=43 // pred_check_branch
          %1154 = sbr.rel (%p1152) target = $region52
        $region51: #{tpu_custom_call.1} parent=43 // pred_region
          %s1155 = sand.u32 %s125, 1
          %s1156 = scalar_lea.sflag [#allocation5], %s1155
          %s1157 = sand.u32 %s125, 1
          %s1158 = smul.addr %s1157, 2
          %s1159 = scalar_lea.vmem [#allocation4], %s1158
          %1160 = dma.done %s1156, 32
        $region52: #{tpu_custom_call.1} parent=43 // pred_fallthru
          _
      $region44: #{tpu_custom_call.1} parent=5 // pred_fallthru
        _
    $region6: #{tpu_custom_call.1} parent=1 // loop_footer
      %s21 = sadd.s32 1, %s17
    $region7: #{tpu_custom_call.1} parent=1 // loop_footer_branch
      %16 = sbr.rel target = $region3
    $region8: #{tpu_custom_call.1} parent=1 // loop_exit
      _
    %1161 = vsyncpa [#allocation3], 1
    %s1162 = scalar_lea.sflag [#allocation3], 1
    %1163 = vsyncpa %s1162, 1
    %1164 = vsyncpa [#allocation5], 1
    %s1165 = scalar_lea.sflag [#allocation5], 1
    %1166 = vsyncpa %s1165, 1

</llo_original>
